<compile_context>
chip_gen: v7x
topology: tpu7x:2x2x1
jax: 0.10.0
libtpu: 0.0.40
codegen_flags: <defaults>
</compile_context>

<pallas_src>
import numpy as np
import jax
import jax.numpy as jnp
from jax import lax
from jax.experimental import pallas as pl
from jax.experimental.pallas import tpu as pltpu

NEG_SLOPE = 0.01  # PyTorch nn.LeakyReLU default negative_slope


# ------------------------------ helpers -------------------------------------

def _pick_lane_tile(R):
    for t in (512, 256, 128):
        if R % t == 0:
            return t
    return R  # small/ragged: full extent (== full array dim, still a legal block)


def _axis_lerp_params(S):
    """align_corners=True, scale 2: out[i] = in[lo_i] + fr_i * (in[hi_i] - in[lo_i])."""
    O = 2 * S
    if S == 1:
        return np.zeros(O, np.int64), np.zeros(O, np.int64), np.zeros(O, np.float32)
    c = np.arange(O, dtype=np.float64) * (S - 1) / (O - 1)
    lo = np.clip(np.floor(c).astype(np.int64), 0, S - 1)
    hi = np.minimum(lo + 1, S - 1)
    fr = (c - lo).astype(np.float32)
    return lo, hi, fr


# ----------------------------- Pallas kernels -------------------------------

def _conv_bias_kernel(p_ref, w_ref, b_ref, o_ref):
    # (Cout, Kp) @ (Kp, TILE) on the MXU, f32 accumulate; bias add fused.
    acc = jnp.dot(w_ref[...], p_ref[0], preferred_element_type=jnp.float32)
    o_ref[0] = acc + b_ref[...]


def _make_upsample_kernel(lo, hi, fr, apply_leaky):
    # Per-axis 2x linear interpolation: each output row is a lerp of two input rows
    # (indices/weights are trace-time constants).  Pure VPU work, exact in f32.
    n_out = len(lo)

    def kernel(x_ref, o_ref):
        x = x_ref[...]                                    # (S, TILE) f32
        rows = []
        for p in range(n_out):
            l_idx, h_idx, f = int(lo[p]), int(hi[p]), float(fr[p])
            a = x[l_idx:l_idx + 1, :]
            if f == 0.0:
                rows.append(a)
            else:
                b = x[h_idx:h_idx + 1, :]
                rows.append(a + f * (b - a))
        y = jnp.concatenate(rows, axis=0)                 # (2S, TILE)
        if apply_leaky:
            y = jnp.where(y >= 0.0, y, NEG_SLOPE * y)
        o_ref[...] = y

    return kernel


# --------------------------- pallas_call wrappers ----------------------------

def _conv_pallas(patches, w2, b2):
    # patches: (N, Kp, DHW), w2: (Cout, Kp), b2: (Cout, 1) -> (N, Cout, DHW)
    N, Kp, M = patches.shape
    Cout = w2.shape[0]
    tile = _pick_lane_tile(M)
    return pl.pallas_call(
        _conv_bias_kernel,
        out_shape=jax.ShapeDtypeStruct((N, Cout, M), jnp.float32),
        grid=(N, pl.cdiv(M, tile)),
        in_specs=[
            pl.BlockSpec((1, Kp, tile), lambda n, j: (n, 0, j)),
            pl.BlockSpec((Cout, Kp), lambda n, j: (0, 0)),
            pl.BlockSpec((Cout, 1), lambda n, j: (0, 0)),
        ],
        out_specs=pl.BlockSpec((1, Cout, tile), lambda n, j: (n, 0, j)),
        compiler_params=pltpu.CompilerParams(
            dimension_semantics=("parallel", "parallel")),
    )(patches, w2, b2)


def _upsample_axis_pallas(x2d, *, leaky):
    # x2d: (S, R) -> (2S, R); axis being interpolated is the (small) sublane axis,
    # the big flattened "rest" axis stays lane-dense and is tiled by the grid.
    S, R = x2d.shape
    O = 2 * S
    lo, hi, fr = _axis_lerp_params(S)
    tile = _pick_lane_tile(R)
    kernel = _make_upsample_kernel(lo, hi, fr, leaky)
    return pl.pallas_call(
        kernel,
        out_shape=jax.ShapeDtypeStruct((O, R), jnp.float32),
        grid=(pl.cdiv(R, tile),),
        in_specs=[pl.BlockSpec((S, tile), lambda j: (0, j))],
        out_specs=pl.BlockSpec((O, tile), lambda j: (0, j)),
        compiler_params=pltpu.CompilerParams(dimension_semantics=("parallel",)),
    )(x2d)


# ------------------------------- forward ------------------------------------

def decoder_block_forward(x, weight, bias):
    # x: (N, Cin, D, H, W), weight: (Cout, Cin, 3, 3, 3), bias: (Cout,)
    N, Cin, D, H, W = x.shape
    Cout = weight.shape[0]
    DHW = D * H * W
    K = Cin * 27
    Kp = ((K + 127) // 128) * 128  # pad reduction dim to 128 lanes (zero-fill)

    # im2col as 27 shifted slices, kept in (N, Cin*27, D*H*W) layout (no big transpose).
    xp = jnp.pad(x, ((0, 0), (0, 0), (1, 1), (1, 1), (1, 1)))
    taps = []
    for kd in range(3):
        for kh in range(3):
            for kw in range(3):
                taps.append(xp[:, :, kd:kd + D, kh:kh + H, kw:kw + W])
    patches = jnp.stack(taps, axis=2).reshape(N, K, DHW)          # (N, Cin*27, DHW)
    patches = jnp.pad(patches, ((0, 0), (0, Kp - K), (0, 0)))     # K -> 128-aligned

    w2 = jnp.pad(weight.reshape(Cout, K), ((0, 0), (0, Kp - K)))  # (Cout, Kp)
    b2 = bias.reshape(Cout, 1).astype(jnp.float32)

    conv = _conv_pallas(patches, w2, b2)                          # (N, Cout, DHW)

    # Separable trilinear 2x upsample: one Pallas lerp kernel per axis.
    # TODO(synk): the inter-stage axis rotations are cheap linear-size XLA transposes; they
    # could be folded into the kernels' out_specs / a single emit_pipeline kernel at scale.
    t = conv.reshape(N, Cout, D, H * W).transpose(2, 3, 0, 1)     # (D, HW, N, C)
    t = t.reshape(D, H * W * N * Cout)
    t = _upsample_axis_pallas(t, leaky=False)                     # (2D, HW*N*C)

    Dp = 2 * D
    t = t.reshape(Dp, H, W * N * Cout).transpose(1, 2, 0)
    t = t.reshape(H, W * N * Cout * Dp)
    t = _upsample_axis_pallas(t, leaky=False)                     # (2H, W*N*C*2D)

    Hp = 2 * H
    t = t.reshape(Hp, W, N * Cout * Dp).transpose(1, 2, 0)
    t = t.reshape(W, N * Cout * Dp * Hp)
    t = _upsample_axis_pallas(t, leaky=True)                      # (2W, N*C*2D*2H) + LeakyReLU

    Wp = 2 * W
    out = t.reshape(Wp, N, Cout, Dp, Hp).transpose(1, 2, 3, 4, 0)  # (N, C, 2D, 2H, 2W)
    return out


# ----------------------------- pure-JAX reference ----------------------------

def _interp_matrix(S):
    lo, hi, fr = _axis_lerp_params(S)
    O = 2 * S
    A = np.zeros((O, S), np.float32)
    A[np.arange(O), lo] += 1.0 - fr
    A[np.arange(O), hi] += fr
    return jnp.asarray(A)


def reference_forward(x, weight, bias):
    conv = lax.conv_general_dilated(
        x, weight, window_strides=(1, 1, 1),
        padding=((1, 1), (1, 1), (1, 1)),
        dimension_numbers=("NCDHW", "OIDHW", "NCDHW"),
        precision=lax.Precision.HIGHEST)
    conv = conv + bias[None, :, None, None, None]
    _, _, D, H, W = conv.shape
    Ad, Ah, Aw = _interp_matrix(D), _interp_matrix(H), _interp_matrix(W)
    up = jnp.einsum("pd,ncdhw->ncphw", Ad, conv, precision=lax.Precision.HIGHEST)
    up = jnp.einsum("qh,ncphw->ncpqw", Ah, up, precision=lax.Precision.HIGHEST)
    up = jnp.einsum("rw,ncpqw->ncpqr", Aw, up, precision=lax.Precision.HIGHEST)
    return jnp.where(up >= 0.0, up, NEG_SLOPE * up)


# ---------------------------------- main -------------------------------------

if __name__ == "__main__":
    key = jax.random.PRNGKey(0)
    k1, k2, k3 = jax.random.split(key, 3)

    N, Cin, Cout, D, H, W = 2, 4, 8, 8, 8, 8
    x = jax.random.normal(k1, (N, Cin, D, H, W), dtype=jnp.float32)

    fan_in = Cin * 3 * 3 * 3
    bound = 1.0 / (fan_in ** 0.5)
    weight = jax.random.uniform(k2, (Cout, Cin, 3, 3, 3), jnp.float32, -bound, bound)
    bias = jax.random.uniform(k3, (Cout,), jnp.float32, -bound, bound)

    fwd = jax.jit(decoder_block_forward)
    out = jax.block_until_ready(fwd(x, weight, bias))

    assert out.shape == (N, Cout, 2 * D, 2 * H, 2 * W), out.shape
    ref = reference_forward(x, weight, bias)
    max_err = float(jnp.max(jnp.abs(out - ref)))
    # Tolerance allows for reduced-precision MXU passes at default matmul precision;
    # typical observed error is orders of magnitude smaller.
    assert max_err < 1e-2, f"max abs error {max_err}"

    print("KERNEL_OK")
</pallas_src>

<mosaic_0001>
module attributes {stable_mosaic.version = 11 : i64} {
  func.func @_conv_bias_kernel(%arg0: i32, %arg1: i32, %arg2: memref<1x128x512xf32, #tpu.memory_space<vmem>>, %arg3: memref<8x128xf32, #tpu.memory_space<vmem>>, %arg4: memref<8x1xf32, #tpu.memory_space<vmem>>, %arg5: memref<1x8x512xf32, #tpu.memory_space<vmem>>) attributes {dimension_semantics = [#tpu.dimension_semantics<parallel>, #tpu.dimension_semantics<parallel>], iteration_bounds = array<i64: 2, 1>, scalar_prefetch = 0 : i64, scratch_operands = 0 : i64, tpu.core_type = #tpu.core_type<tc>, window_params = [{transform_indices = @transform_0, window_bounds = array<i64: 1, 128, 512>}, {pipeline_mode = #tpu.pipeline_mode<synchronous>, transform_indices = @transform_1, window_bounds = array<i64: 8, 128>}, {pipeline_mode = #tpu.pipeline_mode<synchronous>, transform_indices = @transform_2, window_bounds = array<i64: 8, 1>}, {transform_indices = @transform_3, window_bounds = array<i64: 1, 8, 512>}]} {
    %c0 = arith.constant 0 : index
    %c0_0 = arith.constant 0 : index
    %0 = vector.load %arg3[%c0, %c0_0] : memref<8x128xf32, #tpu.memory_space<vmem>>, vector<8x128xf32>
    %c0_1 = arith.constant 0 : index
    %c0_2 = arith.constant 0 : index
    %c0_3 = arith.constant 0 : index
    %1 = vector.load %arg2[%c0_1, %c0_2, %c0_3] : memref<1x128x512xf32, #tpu.memory_space<vmem>>, vector<1x128x512xf32>
    %2 = vector.shape_cast %1 : vector<1x128x512xf32> to vector<128x512xf32>
    %cst = arith.constant dense<0.000000e+00> : vector<8x512xf32>
    %3 = tpu.matmul %0, %2, %cst {dimension_numbers = #tpu.dot_dimension_numbers<[1], [0], [0], [1], [0, 0, 1, 1], [], []>} : vector<8x128xf32>, vector<128x512xf32>, vector<8x512xf32> -> vector<8x512xf32>
    %c0_4 = arith.constant 0 : index
    %c0_5 = arith.constant 0 : index
    %4 = vector.load %arg4[%c0_4, %c0_5] : memref<8x1xf32, #tpu.memory_space<vmem>>, vector<8x1xf32>
    %5 = vector.broadcast %4 : vector<8x1xf32> to vector<8x512xf32>
    %6 = arith.addf %3, %5 : vector<8x512xf32>
    %c0_6 = arith.constant 0 : index
    %c0_7 = arith.constant 0 : index
    %c0_8 = arith.constant 0 : index
    %7 = vector.load %arg5[%c0_6, %c0_7, %c0_8] : memref<1x8x512xf32, #tpu.memory_space<vmem>>, vector<1x8x512xf32>
    %8 = vector.shape_cast %7 : vector<1x8x512xf32> to vector<8x512xf32>
    %9 = vector.shape_cast %6 : vector<8x512xf32> to vector<1x8x512xf32>
    tpu.vector_store %arg5[%c0_6, %c0_7, %c0_8], %9 {strides = array<i32>} : memref<1x8x512xf32, #tpu.memory_space<vmem>>, vector<1x8x512xf32>,
    return
  }
  func.func @transform_0(%arg0: i32, %arg1: i32) -> (i32, i32, i32) {
    %c0_i32 = arith.constant 0 : i32
    %c0_i32_0 = arith.constant 0 : i32
    return %arg0, %c0_i32, %arg1 : i32, i32, i32
  }
  func.func @transform_1(%arg0: i32, %arg1: i32) -> (i32, i32) {
    %c0_i32 = arith.constant 0 : i32
    %c0_i32_0 = arith.constant 0 : i32
    %c0_i32_1 = arith.constant 0 : i32
    return %c0_i32, %c0_i32_0 : i32, i32
  }
  func.func @transform_2(%arg0: i32, %arg1: i32) -> (i32, i32) {
    %c0_i32 = arith.constant 0 : i32
    %c0_i32_0 = arith.constant 0 : i32
    %c0_i32_1 = arith.constant 0 : i32
    return %c0_i32, %c0_i32_0 : i32, i32
  }
  func.func @transform_3(%arg0: i32, %arg1: i32) -> (i32, i32, i32) {
    %c0_i32 = arith.constant 0 : i32
    %c0_i32_0 = arith.constant 0 : i32
    return %arg0, %c0_i32, %arg1 : i32, i32, i32
  }
}

module attributes {stable_mosaic.version = 11 : i64} {
  func.func @kernel(%arg0: i32, %arg1: memref<8x512xf32, #tpu.memory_space<vmem>>, %arg2: memref<16x512xf32, #tpu.memory_space<vmem>>) attributes {dimension_semantics = [#tpu.dimension_semantics<parallel>], iteration_bounds = array<i64: 2>, scalar_prefetch = 0 : i64, scratch_operands = 0 : i64, tpu.core_type = #tpu.core_type<tc>, window_params = [{transform_indices = @transform_0, window_bounds = array<i64: 8, 512>}, {transform_indices = @transform_1, window_bounds = array<i64: 16, 512>}]} {
    %c0 = arith.constant 0 : index
    %c0_0 = arith.constant 0 : index
    %0 = vector.load %arg1[%c0, %c0_0] : memref<8x512xf32, #tpu.memory_space<vmem>>, vector<8x512xf32>
    %1 = vector.extract_strided_slice %0 {offsets = [0, 0], sizes = [1, 512], strides = [1, 1]} : vector<8x512xf32> to vector<1x512xf32>
    %2 = vector.extract_strided_slice %0 {offsets = [0, 0], sizes = [1, 512], strides = [1, 1]} : vector<8x512xf32> to vector<1x512xf32>
    %3 = vector.extract_strided_slice %0 {offsets = [1, 0], sizes = [1, 512], strides = [1, 1]} : vector<8x512xf32> to vector<1x512xf32>
    %4 = arith.subf %3, %2 : vector<1x512xf32>
    %cst = arith.constant 0.466666669 : f32
    %5 = vector.broadcast %cst : f32 to vector<1x512xf32>
    %6 = arith.mulf %5, %4 : vector<1x512xf32>
    %7 = arith.addf %2, %6 : vector<1x512xf32>
    %8 = vector.extract_strided_slice %0 {offsets = [0, 0], sizes = [1, 512], strides = [1, 1]} : vector<8x512xf32> to vector<1x512xf32>
    %9 = vector.extract_strided_slice %0 {offsets = [1, 0], sizes = [1, 512], strides = [1, 1]} : vector<8x512xf32> to vector<1x512xf32>
    %10 = arith.subf %9, %8 : vector<1x512xf32>
    %cst_1 = arith.constant 0.933333337 : f32
    %11 = vector.broadcast %cst_1 : f32 to vector<1x512xf32>
    %12 = arith.mulf %11, %10 : vector<1x512xf32>
    %13 = arith.addf %8, %12 : vector<1x512xf32>
    %14 = vector.extract_strided_slice %0 {offsets = [1, 0], sizes = [1, 512], strides = [1, 1]} : vector<8x512xf32> to vector<1x512xf32>
    %15 = vector.extract_strided_slice %0 {offsets = [2, 0], sizes = [1, 512], strides = [1, 1]} : vector<8x512xf32> to vector<1x512xf32>
    %16 = arith.subf %15, %14 : vector<1x512xf32>
    %cst_2 = arith.constant 4.000000e-01 : f32
    %17 = vector.broadcast %cst_2 : f32 to vector<1x512xf32>
    %18 = arith.mulf %17, %16 : vector<1x512xf32>
    %19 = arith.addf %14, %18 : vector<1x512xf32>
    %20 = vector.extract_strided_slice %0 {offsets = [1, 0], sizes = [1, 512], strides = [1, 1]} : vector<8x512xf32> to vector<1x512xf32>
    %21 = vector.extract_strided_slice %0 {offsets = [2, 0], sizes = [1, 512], strides = [1, 1]} : vector<8x512xf32> to vector<1x512xf32>
    %22 = arith.subf %21, %20 : vector<1x512xf32>
    %cst_3 = arith.constant 0.866666674 : f32
    %23 = vector.broadcast %cst_3 : f32 to vector<1x512xf32>
    %24 = arith.mulf %23, %22 : vector<1x512xf32>
    %25 = arith.addf %20, %24 : vector<1x512xf32>
    %26 = vector.extract_strided_slice %0 {offsets = [2, 0], sizes = [1, 512], strides = [1, 1]} : vector<8x512xf32> to vector<1x512xf32>
    %27 = vector.extract_strided_slice %0 {offsets = [3, 0], sizes = [1, 512], strides = [1, 1]} : vector<8x512xf32> to vector<1x512xf32>
    %28 = arith.subf %27, %26 : vector<1x512xf32>
    %cst_4 = arith.constant 0.333333343 : f32
    %29 = vector.broadcast %cst_4 : f32 to vector<1x512xf32>
    %30 = arith.mulf %29, %28 : vector<1x512xf32>
    %31 = arith.addf %26, %30 : vector<1x512xf32>
    %32 = vector.extract_strided_slice %0 {offsets = [2, 0], sizes = [1, 512], strides = [1, 1]} : vector<8x512xf32> to vector<1x512xf32>
    %33 = vector.extract_strided_slice %0 {offsets = [3, 0], sizes = [1, 512], strides = [1, 1]} : vector<8x512xf32> to vector<1x512xf32>
    %34 = arith.subf %33, %32 : vector<1x512xf32>
    %cst_5 = arith.constant 8.000000e-01 : f32
    %35 = vector.broadcast %cst_5 : f32 to vector<1x512xf32>
    %36 = arith.mulf %35, %34 : vector<1x512xf32>
    %37 = arith.addf %32, %36 : vector<1x512xf32>
    %38 = vector.extract_strided_slice %0 {offsets = [3, 0], sizes = [1, 512], strides = [1, 1]} : vector<8x512xf32> to vector<1x512xf32>
    %39 = vector.extract_strided_slice %0 {offsets = [4, 0], sizes = [1, 512], strides = [1, 1]} : vector<8x512xf32> to vector<1x512xf32>
    %40 = arith.subf %39, %38 : vector<1x512xf32>
    %cst_6 = arith.constant 0.266666681 : f32
    %41 = vector.broadcast %cst_6 : f32 to vector<1x512xf32>
    %42 = arith.mulf %41, %40 : vector<1x512xf32>
    %43 = arith.addf %38, %42 : vector<1x512xf32>
    %44 = vector.extract_strided_slice %0 {offsets = [3, 0], sizes = [1, 512], strides = [1, 1]} : vector<8x512xf32> to vector<1x512xf32>
    %45 = vector.extract_strided_slice %0 {offsets = [4, 0], sizes = [1, 512], strides = [1, 1]} : vector<8x512xf32> to vector<1x512xf32>
    %46 = arith.subf %45, %44 : vector<1x512xf32>
    %cst_7 = arith.constant 0.733333349 : f32
    %47 = vector.broadcast %cst_7 : f32 to vector<1x512xf32>
    %48 = arith.mulf %47, %46 : vector<1x512xf32>
    %49 = arith.addf %44, %48 : vector<1x512xf32>
    %50 = vector.extract_strided_slice %0 {offsets = [4, 0], sizes = [1, 512], strides = [1, 1]} : vector<8x512xf32> to vector<1x512xf32>
    %51 = vector.extract_strided_slice %0 {offsets = [5, 0], sizes = [1, 512], strides = [1, 1]} : vector<8x512xf32> to vector<1x512xf32>
    %52 = arith.subf %51, %50 : vector<1x512xf32>
    %cst_8 = arith.constant 2.000000e-01 : f32
    %53 = vector.broadcast %cst_8 : f32 to vector<1x512xf32>
    %54 = arith.mulf %53, %52 : vector<1x512xf32>
    %55 = arith.addf %50, %54 : vector<1x512xf32>
    %56 = vector.extract_strided_slice %0 {offsets = [4, 0], sizes = [1, 512], strides = [1, 1]} : vector<8x512xf32> to vector<1x512xf32>
    %57 = vector.extract_strided_slice %0 {offsets = [5, 0], sizes = [1, 512], strides = [1, 1]} : vector<8x512xf32> to vector<1x512xf32>
    %58 = arith.subf %57, %56 : vector<1x512xf32>
    %cst_9 = arith.constant 0.666666686 : f32
    %59 = vector.broadcast %cst_9 : f32 to vector<1x512xf32>
    %60 = arith.mulf %59, %58 : vector<1x512xf32>
    %61 = arith.addf %56, %60 : vector<1x512xf32>
    %62 = vector.extract_strided_slice %0 {offsets = [5, 0], sizes = [1, 512], strides = [1, 1]} : vector<8x512xf32> to vector<1x512xf32>
    %63 = vector.extract_strided_slice %0 {offsets = [6, 0], sizes = [1, 512], strides = [1, 1]} : vector<8x512xf32> to vector<1x512xf32>
    %64 = arith.subf %63, %62 : vector<1x512xf32>
    %cst_10 = arith.constant 0.13333334 : f32
    %65 = vector.broadcast %cst_10 : f32 to vector<1x512xf32>
    %66 = arith.mulf %65, %64 : vector<1x512xf32>
    %67 = arith.addf %62, %66 : vector<1x512xf32>
    %68 = vector.extract_strided_slice %0 {offsets = [5, 0], sizes = [1, 512], strides = [1, 1]} : vector<8x512xf32> to vector<1x512xf32>
    %69 = vector.extract_strided_slice %0 {offsets = [6, 0], sizes = [1, 512], strides = [1, 1]} : vector<8x512xf32> to vector<1x512xf32>
    %70 = arith.subf %69, %68 : vector<1x512xf32>
    %cst_11 = arith.constant 6.000000e-01 : f32
    %71 = vector.broadcast %cst_11 : f32 to vector<1x512xf32>
    %72 = arith.mulf %71, %70 : vector<1x512xf32>
    %73 = arith.addf %68, %72 : vector<1x512xf32>
    %74 = vector.extract_strided_slice %0 {offsets = [6, 0], sizes = [1, 512], strides = [1, 1]} : vector<8x512xf32> to vector<1x512xf32>
    %75 = vector.extract_strided_slice %0 {offsets = [7, 0], sizes = [1, 512], strides = [1, 1]} : vector<8x512xf32> to vector<1x512xf32>
    %76 = arith.subf %75, %74 : vector<1x512xf32>
    %cst_12 = arith.constant 0.0666666701 : f32
    %77 = vector.broadcast %cst_12 : f32 to vector<1x512xf32>
    %78 = arith.mulf %77, %76 : vector<1x512xf32>
    %79 = arith.addf %74, %78 : vector<1x512xf32>
    %80 = vector.extract_strided_slice %0 {offsets = [6, 0], sizes = [1, 512], strides = [1, 1]} : vector<8x512xf32> to vector<1x512xf32>
    %81 = vector.extract_strided_slice %0 {offsets = [7, 0], sizes = [1, 512], strides = [1, 1]} : vector<8x512xf32> to vector<1x512xf32>
    %82 = arith.subf %81, %80 : vector<1x512xf32>
    %cst_13 = arith.constant 0.533333361 : f32
    %83 = vector.broadcast %cst_13 : f32 to vector<1x512xf32>
    %84 = arith.mulf %83, %82 : vector<1x512xf32>
    %85 = arith.addf %80, %84 : vector<1x512xf32>
    %86 = vector.extract_strided_slice %0 {offsets = [7, 0], sizes = [1, 512], strides = [1, 1]} : vector<8x512xf32> to vector<1x512xf32>
    %87 = tpu.concatenate %1, %7, %13, %19, %25, %31, %37, %43, %49, %55, %61, %67, %73, %79, %85, %86 in 0 : vector<1x512xf32>, vector<1x512xf32>, vector<1x512xf32>, vector<1x512xf32>, vector<1x512xf32>, vector<1x512xf32>, vector<1x512xf32>, vector<1x512xf32>, vector<1x512xf32>, vector<1x512xf32>, vector<1x512xf32>, vector<1x512xf32>, vector<1x512xf32>, vector<1x512xf32>, vector<1x512xf32>, vector<1x512xf32> -> vector<16x512xf32>
    %c0_14 = arith.constant 0 : index
    %c0_15 = arith.constant 0 : index
    %88 = vector.load %arg2[%c0_14, %c0_15] : memref<16x512xf32, #tpu.memory_space<vmem>>, vector<16x512xf32>
    tpu.vector_store %arg2[%c0_14, %c0_15], %87 {strides = array<i32>} : memref<16x512xf32, #tpu.memory_space<vmem>>, vector<16x512xf32>,
    return
  }
  func.func @transform_0(%arg0: i32) -> (i32, i32) {
    %c0_i32 = arith.constant 0 : i32
    %c0_i32_0 = arith.constant 0 : i32
    return %c0_i32, %arg0 : i32, i32
  }
  func.func @transform_1(%arg0: i32) -> (i32, i32) {
    %c0_i32 = arith.constant 0 : i32
    %c0_i32_0 = arith.constant 0 : i32
    return %c0_i32, %arg0 : i32, i32
  }
}

module attributes {stable_mosaic.version = 11 : i64} {
  func.func @kernel(%arg0: i32, %arg1: memref<8x512xf32, #tpu.memory_space<vmem>>, %arg2: memref<16x512xf32, #tpu.memory_space<vmem>>) attributes {dimension_semantics = [#tpu.dimension_semantics<parallel>], iteration_bounds = array<i64: 4>, scalar_prefetch = 0 : i64, scratch_operands = 0 : i64, tpu.core_type = #tpu.core_type<tc>, window_params = [{transform_indices = @transform_0, window_bounds = array<i64: 8, 512>}, {transform_indices = @transform_1, window_bounds = array<i64: 16, 512>}]} {
    %c0 = arith.constant 0 : index
    %c0_0 = arith.constant 0 : index
    %0 = vector.load %arg1[%c0, %c0_0] : memref<8x512xf32, #tpu.memory_space<vmem>>, vector<8x512xf32>
    %1 = vector.extract_strided_slice %0 {offsets = [0, 0], sizes = [1, 512], strides = [1, 1]} : vector<8x512xf32> to vector<1x512xf32>
    %2 = vector.extract_strided_slice %0 {offsets = [0, 0], sizes = [1, 512], strides = [1, 1]} : vector<8x512xf32> to vector<1x512xf32>
    %3 = vector.extract_strided_slice %0 {offsets = [1, 0], sizes = [1, 512], strides = [1, 1]} : vector<8x512xf32> to vector<1x512xf32>
    %4 = arith.subf %3, %2 : vector<1x512xf32>
    %cst = arith.constant 0.466666669 : f32
    %5 = vector.broadcast %cst : f32 to vector<1x512xf32>
    %6 = arith.mulf %5, %4 : vector<1x512xf32>
    %7 = arith.addf %2, %6 : vector<1x512xf32>
    %8 = vector.extract_strided_slice %0 {offsets = [0, 0], sizes = [1, 512], strides = [1, 1]} : vector<8x512xf32> to vector<1x512xf32>
    %9 = vector.extract_strided_slice %0 {offsets = [1, 0], sizes = [1, 512], strides = [1, 1]} : vector<8x512xf32> to vector<1x512xf32>
    %10 = arith.subf %9, %8 : vector<1x512xf32>
    %cst_1 = arith.constant 0.933333337 : f32
    %11 = vector.broadcast %cst_1 : f32 to vector<1x512xf32>
    %12 = arith.mulf %11, %10 : vector<1x512xf32>
    %13 = arith.addf %8, %12 : vector<1x512xf32>
    %14 = vector.extract_strided_slice %0 {offsets = [1, 0], sizes = [1, 512], strides = [1, 1]} : vector<8x512xf32> to vector<1x512xf32>
    %15 = vector.extract_strided_slice %0 {offsets = [2, 0], sizes = [1, 512], strides = [1, 1]} : vector<8x512xf32> to vector<1x512xf32>
    %16 = arith.subf %15, %14 : vector<1x512xf32>
    %cst_2 = arith.constant 4.000000e-01 : f32
    %17 = vector.broadcast %cst_2 : f32 to vector<1x512xf32>
    %18 = arith.mulf %17, %16 : vector<1x512xf32>
    %19 = arith.addf %14, %18 : vector<1x512xf32>
    %20 = vector.extract_strided_slice %0 {offsets = [1, 0], sizes = [1, 512], strides = [1, 1]} : vector<8x512xf32> to vector<1x512xf32>
    %21 = vector.extract_strided_slice %0 {offsets = [2, 0], sizes = [1, 512], strides = [1, 1]} : vector<8x512xf32> to vector<1x512xf32>
    %22 = arith.subf %21, %20 : vector<1x512xf32>
    %cst_3 = arith.constant 0.866666674 : f32
    %23 = vector.broadcast %cst_3 : f32 to vector<1x512xf32>
    %24 = arith.mulf %23, %22 : vector<1x512xf32>
    %25 = arith.addf %20, %24 : vector<1x512xf32>
    %26 = vector.extract_strided_slice %0 {offsets = [2, 0], sizes = [1, 512], strides = [1, 1]} : vector<8x512xf32> to vector<1x512xf32>
    %27 = vector.extract_strided_slice %0 {offsets = [3, 0], sizes = [1, 512], strides = [1, 1]} : vector<8x512xf32> to vector<1x512xf32>
    %28 = arith.subf %27, %26 : vector<1x512xf32>
    %cst_4 = arith.constant 0.333333343 : f32
    %29 = vector.broadcast %cst_4 : f32 to vector<1x512xf32>
    %30 = arith.mulf %29, %28 : vector<1x512xf32>
    %31 = arith.addf %26, %30 : vector<1x512xf32>
    %32 = vector.extract_strided_slice %0 {offsets = [2, 0], sizes = [1, 512], strides = [1, 1]} : vector<8x512xf32> to vector<1x512xf32>
    %33 = vector.extract_strided_slice %0 {offsets = [3, 0], sizes = [1, 512], strides = [1, 1]} : vector<8x512xf32> to vector<1x512xf32>
    %34 = arith.subf %33, %32 : vector<1x512xf32>
    %cst_5 = arith.constant 8.000000e-01 : f32
    %35 = vector.broadcast %cst_5 : f32 to vector<1x512xf32>
    %36 = arith.mulf %35, %34 : vector<1x512xf32>
    %37 = arith.addf %32, %36 : vector<1x512xf32>
    %38 = vector.extract_strided_slice %0 {offsets = [3, 0], sizes = [1, 512], strides = [1, 1]} : vector<8x512xf32> to vector<1x512xf32>
    %39 = vector.extract_strided_slice %0 {offsets = [4, 0], sizes = [1, 512], strides = [1, 1]} : vector<8x512xf32> to vector<1x512xf32>
    %40 = arith.subf %39, %38 : vector<1x512xf32>
    %cst_6 = arith.constant 0.266666681 : f32
    %41 = vector.broadcast %cst_6 : f32 to vector<1x512xf32>
    %42 = arith.mulf %41, %40 : vector<1x512xf32>
    %43 = arith.addf %38, %42 : vector<1x512xf32>
    %44 = vector.extract_strided_slice %0 {offsets = [3, 0], sizes = [1, 512], strides = [1, 1]} : vector<8x512xf32> to vector<1x512xf32>
    %45 = vector.extract_strided_slice %0 {offsets = [4, 0], sizes = [1, 512], strides = [1, 1]} : vector<8x512xf32> to vector<1x512xf32>
    %46 = arith.subf %45, %44 : vector<1x512xf32>
    %cst_7 = arith.constant 0.733333349 : f32
    %47 = vector.broadcast %cst_7 : f32 to vector<1x512xf32>
    %48 = arith.mulf %47, %46 : vector<1x512xf32>
    %49 = arith.addf %44, %48 : vector<1x512xf32>
    %50 = vector.extract_strided_slice %0 {offsets = [4, 0], sizes = [1, 512], strides = [1, 1]} : vector<8x512xf32> to vector<1x512xf32>
    %51 = vector.extract_strided_slice %0 {offsets = [5, 0], sizes = [1, 512], strides = [1, 1]} : vector<8x512xf32> to vector<1x512xf32>
    %52 = arith.subf %51, %50 : vector<1x512xf32>
    %cst_8 = arith.constant 2.000000e-01 : f32
    %53 = vector.broadcast %cst_8 : f32 to vector<1x512xf32>
    %54 = arith.mulf %53, %52 : vector<1x512xf32>
    %55 = arith.addf %50, %54 : vector<1x512xf32>
    %56 = vector.extract_strided_slice %0 {offsets = [4, 0], sizes = [1, 512], strides = [1, 1]} : vector<8x512xf32> to vector<1x512xf32>
    %57 = vector.extract_strided_slice %0 {offsets = [5, 0], sizes = [1, 512], strides = [1, 1]} : vector<8x512xf32> to vector<1x512xf32>
    %58 = arith.subf %57, %56 : vector<1x512xf32>
    %cst_9 = arith.constant 0.666666686 : f32
    %59 = vector.broadcast %cst_9 : f32 to vector<1x512xf32>
    %60 = arith.mulf %59, %58 : vector<1x512xf32>
    %61 = arith.addf %56, %60 : vector<1x512xf32>
    %62 = vector.extract_strided_slice %0 {offsets = [5, 0], sizes = [1, 512], strides = [1, 1]} : vector<8x512xf32> to vector<1x512xf32>
    %63 = vector.extract_strided_slice %0 {offsets = [6, 0], sizes = [1, 512], strides = [1, 1]} : vector<8x512xf32> to vector<1x512xf32>
    %64 = arith.subf %63, %62 : vector<1x512xf32>
    %cst_10 = arith.constant 0.13333334 : f32
    %65 = vector.broadcast %cst_10 : f32 to vector<1x512xf32>
    %66 = arith.mulf %65, %64 : vector<1x512xf32>
    %67 = arith.addf %62, %66 : vector<1x512xf32>
    %68 = vector.extract_strided_slice %0 {offsets = [5, 0], sizes = [1, 512], strides = [1, 1]} : vector<8x512xf32> to vector<1x512xf32>
    %69 = vector.extract_strided_slice %0 {offsets = [6, 0], sizes = [1, 512], strides = [1, 1]} : vector<8x512xf32> to vector<1x512xf32>
    %70 = arith.subf %69, %68 : vector<1x512xf32>
    %cst_11 = arith.constant 6.000000e-01 : f32
    %71 = vector.broadcast %cst_11 : f32 to vector<1x512xf32>
    %72 = arith.mulf %71, %70 : vector<1x512xf32>
    %73 = arith.addf %68, %72 : vector<1x512xf32>
    %74 = vector.extract_strided_slice %0 {offsets = [6, 0], sizes = [1, 512], strides = [1, 1]} : vector<8x512xf32> to vector<1x512xf32>
    %75 = vector.extract_strided_slice %0 {offsets = [7, 0], sizes = [1, 512], strides = [1, 1]} : vector<8x512xf32> to vector<1x512xf32>
    %76 = arith.subf %75, %74 : vector<1x512xf32>
    %cst_12 = arith.constant 0.0666666701 : f32
    %77 = vector.broadcast %cst_12 : f32 to vector<1x512xf32>
    %78 = arith.mulf %77, %76 : vector<1x512xf32>
    %79 = arith.addf %74, %78 : vector<1x512xf32>
    %80 = vector.extract_strided_slice %0 {offsets = [6, 0], sizes = [1, 512], strides = [1, 1]} : vector<8x512xf32> to vector<1x512xf32>
    %81 = vector.extract_strided_slice %0 {offsets = [7, 0], sizes = [1, 512], strides = [1, 1]} : vector<8x512xf32> to vector<1x512xf32>
    %82 = arith.subf %81, %80 : vector<1x512xf32>
    %cst_13 = arith.constant 0.533333361 : f32
    %83 = vector.broadcast %cst_13 : f32 to vector<1x512xf32>
    %84 = arith.mulf %83, %82 : vector<1x512xf32>
    %85 = arith.addf %80, %84 : vector<1x512xf32>
    %86 = vector.extract_strided_slice %0 {offsets = [7, 0], sizes = [1, 512], strides = [1, 1]} : vector<8x512xf32> to vector<1x512xf32>
    %87 = tpu.concatenate %1, %7, %13, %19, %25, %31, %37, %43, %49, %55, %61, %67, %73, %79, %85, %86 in 0 : vector<1x512xf32>, vector<1x512xf32>, vector<1x512xf32>, vector<1x512xf32>, vector<1x512xf32>, vector<1x512xf32>, vector<1x512xf32>, vector<1x512xf32>, vector<1x512xf32>, vector<1x512xf32>, vector<1x512xf32>, vector<1x512xf32>, vector<1x512xf32>, vector<1x512xf32>, vector<1x512xf32>, vector<1x512xf32> -> vector<16x512xf32>
    %c0_14 = arith.constant 0 : index
    %c0_15 = arith.constant 0 : index
    %88 = vector.load %arg2[%c0_14, %c0_15] : memref<16x512xf32, #tpu.memory_space<vmem>>, vector<16x512xf32>
    tpu.vector_store %arg2[%c0_14, %c0_15], %87 {strides = array<i32>} : memref<16x512xf32, #tpu.memory_space<vmem>>, vector<16x512xf32>,
    return
  }
  func.func @transform_0(%arg0: i32) -> (i32, i32) {
    %c0_i32 = arith.constant 0 : i32
    %c0_i32_0 = arith.constant 0 : i32
    return %c0_i32, %arg0 : i32, i32
  }
  func.func @transform_1(%arg0: i32) -> (i32, i32) {
    %c0_i32 = arith.constant 0 : i32
    %c0_i32_0 = arith.constant 0 : i32
    return %c0_i32, %arg0 : i32, i32
  }
}

module attributes {stable_mosaic.version = 11 : i64} {
  func.func @kernel(%arg0: i32, %arg1: memref<8x512xf32, #tpu.memory_space<vmem>>, %arg2: memref<16x512xf32, #tpu.memory_space<vmem>>) attributes {dimension_semantics = [#tpu.dimension_semantics<parallel>], iteration_bounds = array<i64: 8>, scalar_prefetch = 0 : i64, scratch_operands = 0 : i64, tpu.core_type = #tpu.core_type<tc>, window_params = [{transform_indices = @transform_0, window_bounds = array<i64: 8, 512>}, {transform_indices = @transform_1, window_bounds = array<i64: 16, 512>}]} {
    %c0 = arith.constant 0 : index
    %c0_0 = arith.constant 0 : index
    %0 = vector.load %arg1[%c0, %c0_0] : memref<8x512xf32, #tpu.memory_space<vmem>>, vector<8x512xf32>
    %1 = vector.extract_strided_slice %0 {offsets = [0, 0], sizes = [1, 512], strides = [1, 1]} : vector<8x512xf32> to vector<1x512xf32>
    %2 = vector.extract_strided_slice %0 {offsets = [0, 0], sizes = [1, 512], strides = [1, 1]} : vector<8x512xf32> to vector<1x512xf32>
    %3 = vector.extract_strided_slice %0 {offsets = [1, 0], sizes = [1, 512], strides = [1, 1]} : vector<8x512xf32> to vector<1x512xf32>
    %4 = arith.subf %3, %2 : vector<1x512xf32>
    %cst = arith.constant 0.466666669 : f32
    %5 = vector.broadcast %cst : f32 to vector<1x512xf32>
    %6 = arith.mulf %5, %4 : vector<1x512xf32>
    %7 = arith.addf %2, %6 : vector<1x512xf32>
    %8 = vector.extract_strided_slice %0 {offsets = [0, 0], sizes = [1, 512], strides = [1, 1]} : vector<8x512xf32> to vector<1x512xf32>
    %9 = vector.extract_strided_slice %0 {offsets = [1, 0], sizes = [1, 512], strides = [1, 1]} : vector<8x512xf32> to vector<1x512xf32>
    %10 = arith.subf %9, %8 : vector<1x512xf32>
    %cst_1 = arith.constant 0.933333337 : f32
    %11 = vector.broadcast %cst_1 : f32 to vector<1x512xf32>
    %12 = arith.mulf %11, %10 : vector<1x512xf32>
    %13 = arith.addf %8, %12 : vector<1x512xf32>
    %14 = vector.extract_strided_slice %0 {offsets = [1, 0], sizes = [1, 512], strides = [1, 1]} : vector<8x512xf32> to vector<1x512xf32>
    %15 = vector.extract_strided_slice %0 {offsets = [2, 0], sizes = [1, 512], strides = [1, 1]} : vector<8x512xf32> to vector<1x512xf32>
    %16 = arith.subf %15, %14 : vector<1x512xf32>
    %cst_2 = arith.constant 4.000000e-01 : f32
    %17 = vector.broadcast %cst_2 : f32 to vector<1x512xf32>
    %18 = arith.mulf %17, %16 : vector<1x512xf32>
    %19 = arith.addf %14, %18 : vector<1x512xf32>
    %20 = vector.extract_strided_slice %0 {offsets = [1, 0], sizes = [1, 512], strides = [1, 1]} : vector<8x512xf32> to vector<1x512xf32>
    %21 = vector.extract_strided_slice %0 {offsets = [2, 0], sizes = [1, 512], strides = [1, 1]} : vector<8x512xf32> to vector<1x512xf32>
    %22 = arith.subf %21, %20 : vector<1x512xf32>
    %cst_3 = arith.constant 0.866666674 : f32
    %23 = vector.broadcast %cst_3 : f32 to vector<1x512xf32>
    %24 = arith.mulf %23, %22 : vector<1x512xf32>
    %25 = arith.addf %20, %24 : vector<1x512xf32>
    %26 = vector.extract_strided_slice %0 {offsets = [2, 0], sizes = [1, 512], strides = [1, 1]} : vector<8x512xf32> to vector<1x512xf32>
    %27 = vector.extract_strided_slice %0 {offsets = [3, 0], sizes = [1, 512], strides = [1, 1]} : vector<8x512xf32> to vector<1x512xf32>
    %28 = arith.subf %27, %26 : vector<1x512xf32>
    %cst_4 = arith.constant 0.333333343 : f32
    %29 = vector.broadcast %cst_4 : f32 to vector<1x512xf32>
    %30 = arith.mulf %29, %28 : vector<1x512xf32>
    %31 = arith.addf %26, %30 : vector<1x512xf32>
    %32 = vector.extract_strided_slice %0 {offsets = [2, 0], sizes = [1, 512], strides = [1, 1]} : vector<8x512xf32> to vector<1x512xf32>
    %33 = vector.extract_strided_slice %0 {offsets = [3, 0], sizes = [1, 512], strides = [1, 1]} : vector<8x512xf32> to vector<1x512xf32>
    %34 = arith.subf %33, %32 : vector<1x512xf32>
    %cst_5 = arith.constant 8.000000e-01 : f32
    %35 = vector.broadcast %cst_5 : f32 to vector<1x512xf32>
    %36 = arith.mulf %35, %34 : vector<1x512xf32>
    %37 = arith.addf %32, %36 : vector<1x512xf32>
    %38 = vector.extract_strided_slice %0 {offsets = [3, 0], sizes = [1, 512], strides = [1, 1]} : vector<8x512xf32> to vector<1x512xf32>
    %39 = vector.extract_strided_slice %0 {offsets = [4, 0], sizes = [1, 512], strides = [1, 1]} : vector<8x512xf32> to vector<1x512xf32>
    %40 = arith.subf %39, %38 : vector<1x512xf32>
    %cst_6 = arith.constant 0.266666681 : f32
    %41 = vector.broadcast %cst_6 : f32 to vector<1x512xf32>
    %42 = arith.mulf %41, %40 : vector<1x512xf32>
    %43 = arith.addf %38, %42 : vector<1x512xf32>
    %44 = vector.extract_strided_slice %0 {offsets = [3, 0], sizes = [1, 512], strides = [1, 1]} : vector<8x512xf32> to vector<1x512xf32>
    %45 = vector.extract_strided_slice %0 {offsets = [4, 0], sizes = [1, 512], strides = [1, 1]} : vector<8x512xf32> to vector<1x512xf32>
    %46 = arith.subf %45, %44 : vector<1x512xf32>
    %cst_7 = arith.constant 0.733333349 : f32
    %47 = vector.broadcast %cst_7 : f32 to vector<1x512xf32>
    %48 = arith.mulf %47, %46 : vector<1x512xf32>
    %49 = arith.addf %44, %48 : vector<1x512xf32>
    %50 = vector.extract_strided_slice %0 {offsets = [4, 0], sizes = [1, 512], strides = [1, 1]} : vector<8x512xf32> to vector<1x512xf32>
    %51 = vector.extract_strided_slice %0 {offsets = [5, 0], sizes = [1, 512], strides = [1, 1]} : vector<8x512xf32> to vector<1x512xf32>
    %52 = arith.subf %51, %50 : vector<1x512xf32>
    %cst_8 = arith.constant 2.000000e-01 : f32
    %53 = vector.broadcast %cst_8 : f32 to vector<1x512xf32>
    %54 = arith.mulf %53, %52 : vector<1x512xf32>
    %55 = arith.addf %50, %54 : vector<1x512xf32>
    %56 = vector.extract_strided_slice %0 {offsets = [4, 0], sizes = [1, 512], strides = [1, 1]} : vector<8x512xf32> to vector<1x512xf32>
    %57 = vector.extract_strided_slice %0 {offsets = [5, 0], sizes = [1, 512], strides = [1, 1]} : vector<8x512xf32> to vector<1x512xf32>
    %58 = arith.subf %57, %56 : vector<1x512xf32>
    %cst_9 = arith.constant 0.666666686 : f32
    %59 = vector.broadcast %cst_9 : f32 to vector<1x512xf32>
    %60 = arith.mulf %59, %58 : vector<1x512xf32>
    %61 = arith.addf %56, %60 : vector<1x512xf32>
    %62 = vector.extract_strided_slice %0 {offsets = [5, 0], sizes = [1, 512], strides = [1, 1]} : vector<8x512xf32> to vector<1x512xf32>
    %63 = vector.extract_strided_slice %0 {offsets = [6, 0], sizes = [1, 512], strides = [1, 1]} : vector<8x512xf32> to vector<1x512xf32>
    %64 = arith.subf %63, %62 : vector<1x512xf32>
    %cst_10 = arith.constant 0.13333334 : f32
    %65 = vector.broadcast %cst_10 : f32 to vector<1x512xf32>
    %66 = arith.mulf %65, %64 : vector<1x512xf32>
    %67 = arith.addf %62, %66 : vector<1x512xf32>
    %68 = vector.extract_strided_slice %0 {offsets = [5, 0], sizes = [1, 512], strides = [1, 1]} : vector<8x512xf32> to vector<1x512xf32>
    %69 = vector.extract_strided_slice %0 {offsets = [6, 0], sizes = [1, 512], strides = [1, 1]} : vector<8x512xf32> to vector<1x512xf32>
    %70 = arith.subf %69, %68 : vector<1x512xf32>
    %cst_11 = arith.constant 6.000000e-01 : f32
    %71 = vector.broadcast %cst_11 : f32 to vector<1x512xf32>
    %72 = arith.mulf %71, %70 : vector<1x512xf32>
    %73 = arith.addf %68, %72 : vector<1x512xf32>
    %74 = vector.extract_strided_slice %0 {offsets = [6, 0], sizes = [1, 512], strides = [1, 1]} : vector<8x512xf32> to vector<1x512xf32>
    %75 = vector.extract_strided_slice %0 {offsets = [7, 0], sizes = [1, 512], strides = [1, 1]} : vector<8x512xf32> to vector<1x512xf32>
    %76 = arith.subf %75, %74 : vector<1x512xf32>
    %cst_12 = arith.constant 0.0666666701 : f32
    %77 = vector.broadcast %cst_12 : f32 to vector<1x512xf32>
    %78 = arith.mulf %77, %76 : vector<1x512xf32>
    %79 = arith.addf %74, %78 : vector<1x512xf32>
    %80 = vector.extract_strided_slice %0 {offsets = [6, 0], sizes = [1, 512], strides = [1, 1]} : vector<8x512xf32> to vector<1x512xf32>
    %81 = vector.extract_strided_slice %0 {offsets = [7, 0], sizes = [1, 512], strides = [1, 1]} : vector<8x512xf32> to vector<1x512xf32>
    %82 = arith.subf %81, %80 : vector<1x512xf32>
    %cst_13 = arith.constant 0.533333361 : f32
    %83 = vector.broadcast %cst_13 : f32 to vector<1x512xf32>
    %84 = arith.mulf %83, %82 : vector<1x512xf32>
    %85 = arith.addf %80, %84 : vector<1x512xf32>
    %86 = vector.extract_strided_slice %0 {offsets = [7, 0], sizes = [1, 512], strides = [1, 1]} : vector<8x512xf32> to vector<1x512xf32>
    %87 = tpu.concatenate %1, %7, %13, %19, %25, %31, %37, %43, %49, %55, %61, %67, %73, %79, %85, %86 in 0 : vector<1x512xf32>, vector<1x512xf32>, vector<1x512xf32>, vector<1x512xf32>, vector<1x512xf32>, vector<1x512xf32>, vector<1x512xf32>, vector<1x512xf32>, vector<1x512xf32>, vector<1x512xf32>, vector<1x512xf32>, vector<1x512xf32>, vector<1x512xf32>, vector<1x512xf32>, vector<1x512xf32>, vector<1x512xf32> -> vector<16x512xf32>
    %cst_14 = arith.constant 0.000000e+00 : f32
    %88 = vector.broadcast %cst_14 : f32 to vector<16x512xf32>
    %89 = arith.cmpf oge, %87, %88 : vector<16x512xf32>
    %cst_15 = arith.constant 0.00999999977 : f32
    %90 = vector.broadcast %cst_15 : f32 to vector<16x512xf32>
    %91 = arith.mulf %90, %87 : vector<16x512xf32>
    %92 = arith.select %89, %87, %91 : vector<16x512xi1>, vector<16x512xf32>
    %c0_16 = arith.constant 0 : index
    %c0_17 = arith.constant 0 : index
    %93 = vector.load %arg2[%c0_16, %c0_17] : memref<16x512xf32, #tpu.memory_space<vmem>>, vector<16x512xf32>
    tpu.vector_store %arg2[%c0_16, %c0_17], %92 {strides = array<i32>} : memref<16x512xf32, #tpu.memory_space<vmem>>, vector<16x512xf32>,
    return
  }
  func.func @transform_0(%arg0: i32) -> (i32, i32) {
    %c0_i32 = arith.constant 0 : i32
    %c0_i32_0 = arith.constant 0 : i32
    return %c0_i32, %arg0 : i32, i32
  }
  func.func @transform_1(%arg0: i32) -> (i32, i32) {
    %c0_i32 = arith.constant 0 : i32
    %c0_i32_0 = arith.constant 0 : i32
    return %c0_i32, %arg0 : i32, i32
  }
}

</mosaic_0001>

<llo_original>
// kernel: decoder_block_forward.4
$region0: #{decoder_block_forward.4}
  #allocation0 [shape = 'u32[]', space=smem, size = 0x4, offset = 0x4, fixed_abs, tag = 'smem constant byte address 0x4 - core index']
  #allocation1 [shape = 'u32[144,128]{1,0:T(1,128)}', space=vmem, size = 0x12000, scoped, tag = 'internal scratch']
  %s0 = inlined_call_operand.vmem [shape: f32[2,128,512], index: 0, kind: input, shape index: {}]
  %s1 = inlined_call_operand.vmem [shape: f32[8,128], index: 1, kind: input, shape index: {}]
  %s2 = inlined_call_operand.vmem [shape: f32[8,1], index: 2, kind: input, shape index: {}]
  %s3 = inlined_call_operand.vmem [shape: f32[2,8,512], index: 3, kind: output, shape index: {}]
  %s4 = sld [smem:[#allocation0]]
  $region45: #{decoder_block_forward.4} parent=0
    _
  %s6 = ssub.s32 1, %s4
  %s7 = scalar_select 0, %s6, %s4
  loop: start=0, step=1, limit=4
  $region2: #{decoder_block_forward.4} parent=0 // loop_pre_header
    _
  $region3: #{decoder_block_forward.4} parent=0 // loop_header
    %s9 = sphi 0, %s13
    %p10 = scmp.ge.s32.totalorder %s9, 4
    %s16 = sphi 0, %s28
    %s17 = sphi 0, %s24
    %s18 = sphi 0, %s16
    %s19 = sphi 0, %s17
    %s20 = sphi 0, %s18
    %s21 = sphi 0, %s19
    %s33 = sphi 0, %s35
    %s36 = sphi 0, %s33
    %s37 = sphi 0, %s36
    %s53 = sphi 0, %s37
    %s57 = sphi 0, %s57
    %s59 = sphi 0, %s57
    %s60 = sphi 0, %s59
    %s74 = sphi 0, %s60
    %s78 = sphi 0, %s78
    %s80 = sphi 0, %s78
    %s81 = sphi 0, %s80
    %s95 = sphi 0, %s81
    %s103 = sphi 0, %s105
    %s106 = sphi 0, %s103
    %s107 = sphi 0, %s106
    %s123 = sphi 0, %s107
  $region4: #{decoder_block_forward.4} parent=0 // loop_header_branch
    %12 = sbr.rel (%p10) target = $region8
  $region5: #{decoder_block_forward.4} parent=0 // loop_body
    %s14 = ssub.s32 %s9, 1
    %s15 = ssub.s32 %s9, 2
    %s22 = sadd.s32 1, %s17
    %p23 = scmp.ge.s32.totalorder %s22, 1
    %s24 = scalar_select %p23, 0, %s22
    %s25 = sadd.s32 1, %s16
    %s26 = scalar_select %p23, %s25, %s16
    %p27 = scmp.ge.s32.totalorder %s26, 2
    %s28 = scalar_select %p27, 0, %s26
    %s29 = ssub.s32 %s16, %s28
    %s30 = ssub.s32 %s17, %s24
    %s31 = sor.u32 %s29, %s30
    %p32 = scmp.eq.s32.totalorder %s31, 0
    %s34 = sadd.s32 %s33, 1
    %s35 = scalar_select %p32, %s33, %s34
    %p38 = pneg %p32
    %p39 = scmp.eq.s32.totalorder %s9, 1
    %p40 = por %p38, %p39
    %p41 = scmp.ne.s32.totalorder %s33, %s36
    %p42 = scmp.eq.s32.totalorder %s9, 0
    %p43 = por %p41, %p42
    %p44 = scmp.ne.s32.totalorder %s33, %s36
    %p45 = scmp.eq.s32.totalorder %s14, 1
    %p46 = por %p44, %p45
    %p47 = scmp.ne.s32.totalorder %s36, %s37
    %p48 = scmp.eq.s32.totalorder %s14, 0
    %p49 = por %p47, %p48
    %p50 = scmp.ne.s32.totalorder %s36, %s37
    %p51 = scmp.eq.s32.totalorder %s15, 1
    %p52 = por %p50, %p51
    %p54 = scmp.ne.s32.totalorder %s37, %s53
    %p55 = scmp.eq.s32.totalorder %s15, 0
    %p56 = por %p54, %p55
    %s58 = sadd.s32 %s57, 1
    %p61 = scmp.eq.s32.totalorder %s9, 1
    %p62 = scmp.ne.s32.totalorder %s57, %s59
    %p63 = scmp.eq.s32.totalorder %s9, 0
    %p64 = por %p62, %p63
    %p65 = scmp.ne.s32.totalorder %s57, %s59
    %p66 = scmp.eq.s32.totalorder %s14, 1
    %p67 = por %p65, %p66
    %p68 = scmp.ne.s32.totalorder %s59, %s60
    %p69 = scmp.eq.s32.totalorder %s14, 0
    %p70 = por %p68, %p69
    %p71 = scmp.ne.s32.totalorder %s59, %s60
    %p72 = scmp.eq.s32.totalorder %s15, 1
    %p73 = por %p71, %p72
    %p75 = scmp.ne.s32.totalorder %s60, %s74
    %p76 = scmp.eq.s32.totalorder %s15, 0
    %p77 = por %p75, %p76
    %s79 = sadd.s32 %s78, 1
    %p82 = scmp.eq.s32.totalorder %s9, 1
    %p83 = scmp.ne.s32.totalorder %s78, %s80
    %p84 = scmp.eq.s32.totalorder %s9, 0
    %p85 = por %p83, %p84
    %p86 = scmp.ne.s32.totalorder %s78, %s80
    %p87 = scmp.eq.s32.totalorder %s14, 1
    %p88 = por %p86, %p87
    %p89 = scmp.ne.s32.totalorder %s80, %s81
    %p90 = scmp.eq.s32.totalorder %s14, 0
    %p91 = por %p89, %p90
    %p92 = scmp.ne.s32.totalorder %s80, %s81
    %p93 = scmp.eq.s32.totalorder %s15, 1
    %p94 = por %p92, %p93
    %p96 = scmp.ne.s32.totalorder %s81, %s95
    %p97 = scmp.eq.s32.totalorder %s15, 0
    %p98 = por %p96, %p97
    %s99 = ssub.s32 %s16, %s28
    %s100 = ssub.s32 %s17, %s24
    %s101 = sor.u32 %s99, %s100
    %p102 = scmp.eq.s32.totalorder %s101, 0
    %s104 = sadd.s32 %s103, 1
    %s105 = scalar_select %p102, %s103, %s104
    %p108 = pneg %p102
    %p109 = scmp.eq.s32.totalorder %s9, 1
    %p110 = por %p108, %p109
    %p111 = scmp.ne.s32.totalorder %s103, %s106
    %p112 = scmp.eq.s32.totalorder %s9, 0
    %p113 = por %p111, %p112
    %p114 = scmp.ne.s32.totalorder %s103, %s106
    %p115 = scmp.eq.s32.totalorder %s14, 1
    %p116 = por %p114, %p115
    %p117 = scmp.ne.s32.totalorder %s106, %s107
    %p118 = scmp.eq.s32.totalorder %s14, 0
    %p119 = por %p117, %p118
    %p120 = scmp.ne.s32.totalorder %s106, %s107
    %p121 = scmp.eq.s32.totalorder %s15, 1
    %p122 = por %p120, %p121
    %p124 = scmp.ne.s32.totalorder %s107, %s123
    %p125 = scmp.eq.s32.totalorder %s15, 0
    %p126 = por %p124, %p125
    %p127 = scmp.le.s32.totalorder 1, %s9
    %p128 = scmp.lt.s32.totalorder %s9, 3
    %p129 = pnand %p127, %p128
    %p130 = pneg %p129
    // Predicated region
    $region9: #{decoder_block_forward.4} parent=5 // pred_check
      _
    $region10: #{decoder_block_forward.4} parent=5 // pred_check_branch
      %132 = sbr.rel (%p129) target = $region12
    $region11: #{decoder_block_forward.4} parent=5 // pred_region
      %s133 = ssub.s32 %s9, 1
      // Predicated region
      $region13: #{decoder_block_forward.4} parent=11 // pred_check
        %p134 = pneg %p70
      $region14: #{decoder_block_forward.4} parent=11 // pred_check_branch
        %136 = sbr.rel (%p134) target = $region16
      $region15: #{decoder_block_forward.4} parent=11 // pred_region
        _
      $region16: #{decoder_block_forward.4} parent=11 // pred_fallthru
        _
      // Predicated region
      $region17: #{decoder_block_forward.4} parent=11 // pred_check
        %p137 = pneg %p91
      $region18: #{decoder_block_forward.4} parent=11 // pred_check_branch
        %139 = sbr.rel (%p137) target = $region20
      $region19: #{decoder_block_forward.4} parent=11 // pred_region
        _
      $region20: #{decoder_block_forward.4} parent=11 // pred_fallthru
        _
    $region12: #{decoder_block_forward.4} parent=5 // pred_fallthru
      _
    %p140 = scmp.lt.s32.totalorder %s9, 2
    // Predicated region
    $region21: #{decoder_block_forward.4} parent=5 // pred_check
      %p141 = pneg %p140
    $region22: #{decoder_block_forward.4} parent=5 // pred_check_branch
      %143 = sbr.rel (%p141) target = $region24
    $region23: #{decoder_block_forward.4} parent=5 // pred_region
      // Predicated region
      $region25: #{decoder_block_forward.4} parent=23 // pred_check
        %p144 = pneg %p43
      $region26: #{decoder_block_forward.4} parent=23 // pred_check_branch
        %146 = sbr.rel (%p144) target = $region28
      $region27: #{decoder_block_forward.4} parent=23 // pred_region
        %s147 = smul.u32 4, %s17
        %p148 = scmp.lt.s32.totalorder %s16, 1
        %s149 = scalar_select %p148, %s16, 1
        %p150 = scmp.lt.s32.totalorder %s147, 3
        %s151 = scalar_select %p150, %s147, 3
        %s152 = smul.addr %s149, 64
        %s153 = sadd.s32 %s151, %s152
        %s154 = smul.addr %s153, 8
        %s155 = scalar_lea.vmem %s0, %s154
        %s156 = smul.u32 4, %s17
      $region28: #{decoder_block_forward.4} parent=23 // pred_fallthru
        _
    $region24: #{decoder_block_forward.4} parent=5 // pred_fallthru
      _
    %p157 = scmp.le.s32.totalorder 1, %s9
    %p158 = scmp.lt.s32.totalorder %s9, 3
    %p159 = pnand %p157, %p158
    %p160 = pneg %p159
    // Predicated region
    $region29: #{decoder_block_forward.4} parent=5 // pred_check
      _
    $region30: #{decoder_block_forward.4} parent=5 // pred_check_branch
      %162 = sbr.rel (%p159) target = $region32
    $region31: #{decoder_block_forward.4} parent=5 // pred_region
      %s163 = ssub.s32 %s9, 1
      %s164 = smul.u32 4, %s19
      %p165 = scmp.lt.s32.totalorder %s18, 1
      %s166 = scalar_select %p165, %s18, 1
      %p167 = scmp.lt.s32.totalorder %s164, 3
      %s168 = scalar_select %p167, %s164, 3
      %s169 = smul.addr %s166, 64
      %s170 = sadd.s32 %s168, %s169
      %s171 = smul.addr %s170, 8
      %s172 = scalar_lea.vmem %s0, %s171
      %p173 = pneg %p49
      %p174 = pneg %p46
      %p175 = pneg %p70
      %p176 = pneg %p67
      %p177 = pneg %p91
      %p178 = pneg %p88
      %p179 = pneg %p119
      %p180 = pneg %p116
      %s181 = smul.u32 4, %s19
      %p182 = scmp.lt.s32.totalorder %s18, 1
      %s183 = scalar_select %p182, %s18, 1
      %p184 = scmp.lt.s32.totalorder %s181, 3
      %s185 = scalar_select %p184, %s181, 3
      %s186 = smul.addr %s183, 4
      %s187 = sadd.s32 %s185, %s186
      %s188 = smul.addr %s187, 8
      %s189 = scalar_lea.vmem %s3, %s188
      %s190 = smul.u32 4, %s19
      %p191 = scmp.lt.s32.totalorder %s18, 1
      %s192 = scalar_select %p191, %s18, 1
      %p193 = scmp.lt.s32.totalorder %s190, 3
      %s194 = scalar_select %p193, %s190, 3
      %s195 = smul.addr %s192, 64
      %s196 = sadd.s32 %s194, %s195
      %s197 = smul.addr %s196, 8
      %s198 = scalar_lea.vmem %s0, %s197
      %s199 = smul.u32 4, %s19
      %s200 = smul.u32 4, %s19
      %p201 = scmp.lt.s32.totalorder %s18, 1
      %s202 = scalar_select %p201, %s18, 1
      %p203 = scmp.lt.s32.totalorder %s200, 3
      %s204 = scalar_select %p203, %s200, 3
      %s205 = smul.addr %s202, 4
      %s206 = sadd.s32 %s204, %s205
      %s207 = smul.addr %s206, 8
      %s208 = scalar_lea.vmem %s3, %s207
      %s209 = smul.u32 4, %s19
      %v210 = vld [vmem:[%s1] sm:$0xff]
      %v211 = vld [vmem:[%s198] sm:$0xff]
      %v212 = vld [vmem:[%s198 + $0x8] sm:$0xff]
      %v213 = vld [vmem:[%s198 + $0x10] sm:$0xff]
      %v214 = vld [vmem:[%s198 + $0x18] sm:$0xff]
      %v215 = vld [vmem:[%s198 + $0x20] sm:$0xff]
      %v216 = vld [vmem:[%s198 + $0x28] sm:$0xff]
      %v217 = vld [vmem:[%s198 + $0x30] sm:$0xff]
      %v218 = vld [vmem:[%s198 + $0x38] sm:$0xff]
      %v219 = vld [vmem:[%s198 + $0x40] sm:$0xff]
      %v220 = vld [vmem:[%s198 + $0x48] sm:$0xff]
      %v221 = vld [vmem:[%s198 + $0x50] sm:$0xff]
      %v222 = vld [vmem:[%s198 + $0x58] sm:$0xff]
      %v223 = vld [vmem:[%s198 + $0x60] sm:$0xff]
      %v224 = vld [vmem:[%s198 + $0x68] sm:$0xff]
      %v225 = vld [vmem:[%s198 + $0x70] sm:$0xff]
      %v226 = vld [vmem:[%s198 + $0x78] sm:$0xff]
      %v227 = vld [vmem:[%s198 + $0x80] sm:$0xff]
      %v228 = vld [vmem:[%s198 + $0x88] sm:$0xff]
      %v229 = vld [vmem:[%s198 + $0x90] sm:$0xff]
      %v230 = vld [vmem:[%s198 + $0x98] sm:$0xff]
      %v231 = vld [vmem:[%s198 + $0xa0] sm:$0xff]
      %v232 = vld [vmem:[%s198 + $0xa8] sm:$0xff]
      %v233 = vld [vmem:[%s198 + $0xb0] sm:$0xff]
      %v234 = vld [vmem:[%s198 + $0xb8] sm:$0xff]
      %v235 = vld [vmem:[%s198 + $0xc0] sm:$0xff]
      %v236 = vld [vmem:[%s198 + $0xc8] sm:$0xff]
      %v237 = vld [vmem:[%s198 + $0xd0] sm:$0xff]
      %v238 = vld [vmem:[%s198 + $0xd8] sm:$0xff]
      %v239 = vld [vmem:[%s198 + $0xe0] sm:$0xff]
      %v240 = vld [vmem:[%s198 + $0xe8] sm:$0xff]
      %v241 = vld [vmem:[%s198 + $0xf0] sm:$0xff]
      %v242 = vld [vmem:[%s198 + $0xf8] sm:$0xff]
      %v243 = vld [vmem:[%s198 + $0x100] sm:$0xff]
      %v244 = vld [vmem:[%s198 + $0x108] sm:$0xff]
      %v245 = vld [vmem:[%s198 + $0x110] sm:$0xff]
      %v246 = vld [vmem:[%s198 + $0x118] sm:$0xff]
      %v247 = vld [vmem:[%s198 + $0x120] sm:$0xff]
      %v248 = vld [vmem:[%s198 + $0x128] sm:$0xff]
      %v249 = vld [vmem:[%s198 + $0x130] sm:$0xff]
      %v250 = vld [vmem:[%s198 + $0x138] sm:$0xff]
      %v251 = vld [vmem:[%s198 + $0x140] sm:$0xff]
      %v252 = vld [vmem:[%s198 + $0x148] sm:$0xff]
      %v253 = vld [vmem:[%s198 + $0x150] sm:$0xff]
      %v254 = vld [vmem:[%s198 + $0x158] sm:$0xff]
      %v255 = vld [vmem:[%s198 + $0x160] sm:$0xff]
      %v256 = vld [vmem:[%s198 + $0x168] sm:$0xff]
      %v257 = vld [vmem:[%s198 + $0x170] sm:$0xff]
      %v258 = vld [vmem:[%s198 + $0x178] sm:$0xff]
      %v259 = vld [vmem:[%s198 + $0x180] sm:$0xff]
      %v260 = vld [vmem:[%s198 + $0x188] sm:$0xff]
      %v261 = vld [vmem:[%s198 + $0x190] sm:$0xff]
      %v262 = vld [vmem:[%s198 + $0x198] sm:$0xff]
      %v263 = vld [vmem:[%s198 + $0x1a0] sm:$0xff]
      %v264 = vld [vmem:[%s198 + $0x1a8] sm:$0xff]
      %v265 = vld [vmem:[%s198 + $0x1b0] sm:$0xff]
      %v266 = vld [vmem:[%s198 + $0x1b8] sm:$0xff]
      %v267 = vld [vmem:[%s198 + $0x1c0] sm:$0xff]
      %v268 = vld [vmem:[%s198 + $0x1c8] sm:$0xff]
      %v269 = vld [vmem:[%s198 + $0x1d0] sm:$0xff]
      %v270 = vld [vmem:[%s198 + $0x1d8] sm:$0xff]
      %v271 = vld [vmem:[%s198 + $0x1e0] sm:$0xff]
      %v272 = vld [vmem:[%s198 + $0x1e8] sm:$0xff]
      %v273 = vld [vmem:[%s198 + $0x1f0] sm:$0xff]
      %v274 = vld [vmem:[%s198 + $0x1f8] sm:$0xff]
      %v275 = vld [vmem:[%s2] sm:$0xff]
      %277 = vset.pattern.permute.xlu0 0
      %278 = vperm.xlu0 %277, %v275
      %v279 = vpop.permute.xlu0 %278
      %281 = vmatprep.subr.mxu0 %v212
      %282 = vmatpush1.msra.mxu0 %v211
      %283 = vmatprep.subr.mxu0 %v216
      %284 = vmatpush1.msra.mxu0 %v215
      %285 = vmatprep.subr.mxu0 %v220
      %286 = vmatpush1.msra.mxu0 %v219
      %287 = vmatprep.subr.mxu0 %v224
      %288 = vmatpush1.msra.mxu0 %v223
      %289 = vmatprep.subr.mxu0 %v228
      %290 = vmatpush1.msra.mxu0 %v227
      %291 = vmatprep.subr.mxu0 %v232
      %292 = vmatpush1.msra.mxu0 %v231
      %293 = vmatprep.subr.mxu0 %v236
      %294 = vmatpush1.msra.mxu0 %v235
      %295 = vmatprep.subr.mxu0 %v240
      %296 = vmatpush1.msra.mxu0 %v239
      %297 = vmatprep.subr.mxu0 %v244
      %298 = vmatpush1.msra.mxu0 %v243
      %299 = vmatprep.subr.mxu0 %v248
      %300 = vmatpush1.msra.mxu0 %v247
      %301 = vmatprep.subr.mxu0 %v252
      %302 = vmatpush1.msra.mxu0 %v251
      %303 = vmatprep.subr.mxu0 %v256
      %304 = vmatpush1.msra.mxu0 %v255
      %305 = vmatprep.subr.mxu0 %v260
      %306 = vmatpush1.msra.mxu0 %v259
      %307 = vmatprep.subr.mxu0 %v264
      %308 = vmatpush1.msra.mxu0 %v263
      %309 = vmatprep.subr.mxu0 %v268
      %310 = vmatpush1.msra.mxu0 %v267
      %311 = vmatprep.subr.mxu0 %v272
      %312 = vmatpush1.msra.mxu0 %v271
      %313 = vmatprep.subr.mxu0 0.0
      %314 = vmatpush1.msra.mxu0 0.0
      %315 = vmatprep.subr.mxu0 0.0
      %316 = vmatpush1.msra.mxu0 0.0
      %317 = vmatprep.subr.mxu0 0.0
      %318 = vmatpush1.msra.mxu0 0.0
      %319 = vmatprep.subr.mxu0 0.0
      %320 = vmatpush1.msra.mxu0 0.0
      %321 = vmatprep.subr.mxu0 0.0
      %322 = vmatpush1.msra.mxu0 0.0
      %323 = vmatprep.subr.mxu0 0.0
      %324 = vmatpush1.msra.mxu0 0.0
      %325 = vmatprep.subr.mxu0 0.0
      %326 = vmatpush1.msra.mxu0 0.0
      %327 = vmatprep.subr.mxu0 0.0
      %328 = vmatpush1.msra.mxu0 0.0
      %329 = vmatprep.subr.mxu0 0.0
      %330 = vmatpush1.msra.mxu0 0.0
      %331 = vmatprep.subr.mxu0 0.0
      %332 = vmatpush1.msra.mxu0 0.0
      %333 = vmatprep.subr.mxu0 0.0
      %334 = vmatpush1.msra.mxu0 0.0
      %335 = vmatprep.subr.mxu0 0.0
      %336 = vmatpush1.msra.mxu0 0.0
      %337 = vmatprep.subr.mxu0 0.0
      %338 = vmatpush1.msra.mxu0 0.0
      %339 = vmatprep.subr.mxu0 0.0
      %340 = vmatpush1.msra.mxu0 0.0
      %341 = vmatprep.subr.mxu0 0.0
      %342 = vmatpush1.msra.mxu0 0.0
      %343 = vmatprep.subr.mxu0 0.0
      %344 = vmatpush1.msra.mxu0 0.0
      %345 = vmatprep.mubr.f32.mxu0 0.0
      %346 = vmatmul.mubr.f32.gmra.mrb[0].mxu0 %v210
      %v347 = vpop.f32.mrb[0].mxu0
      %v348 = vadd.f32 %v279, %v347
      %v349 = vpop.f32.mrb[0].mxu0
      %v350 = vadd.f32 %v279, %v349
      %351 = vdwg.mxu0
      %352 = vmatprep.subr.mxu0 %v214
      %353 = vmatpush1.msra.mxu0 %v213
      %354 = vmatprep.subr.mxu0 %v218
      %355 = vmatpush1.msra.mxu0 %v217
      %356 = vmatprep.subr.mxu0 %v222
      %357 = vmatpush1.msra.mxu0 %v221
      %358 = vmatprep.subr.mxu0 %v226
      %359 = vmatpush1.msra.mxu0 %v225
      %360 = vmatprep.subr.mxu0 %v230
      %361 = vmatpush1.msra.mxu0 %v229
      %362 = vmatprep.subr.mxu0 %v234
      %363 = vmatpush1.msra.mxu0 %v233
      %364 = vmatprep.subr.mxu0 %v238
      %365 = vmatpush1.msra.mxu0 %v237
      %366 = vmatprep.subr.mxu0 %v242
      %367 = vmatpush1.msra.mxu0 %v241
      %368 = vmatprep.subr.mxu0 %v246
      %369 = vmatpush1.msra.mxu0 %v245
      %370 = vmatprep.subr.mxu0 %v250
      %371 = vmatpush1.msra.mxu0 %v249
      %372 = vmatprep.subr.mxu0 %v254
      %373 = vmatpush1.msra.mxu0 %v253
      %374 = vmatprep.subr.mxu0 %v258
      %375 = vmatpush1.msra.mxu0 %v257
      %376 = vmatprep.subr.mxu0 %v262
      %377 = vmatpush1.msra.mxu0 %v261
      %378 = vmatprep.subr.mxu0 %v266
      %379 = vmatpush1.msra.mxu0 %v265
      %380 = vmatprep.subr.mxu0 %v270
      %381 = vmatpush1.msra.mxu0 %v269
      %382 = vmatprep.subr.mxu0 %v274
      %383 = vmatpush1.msra.mxu0 %v273
      %384 = vmatprep.subr.mxu0 0.0
      %385 = vmatpush1.msra.mxu0 0.0
      %386 = vmatprep.subr.mxu0 0.0
      %387 = vmatpush1.msra.mxu0 0.0
      %388 = vmatprep.subr.mxu0 0.0
      %389 = vmatpush1.msra.mxu0 0.0
      %390 = vmatprep.subr.mxu0 0.0
      %391 = vmatpush1.msra.mxu0 0.0
      %392 = vmatprep.subr.mxu0 0.0
      %393 = vmatpush1.msra.mxu0 0.0
      %394 = vmatprep.subr.mxu0 0.0
      %395 = vmatpush1.msra.mxu0 0.0
      %396 = vmatprep.subr.mxu0 0.0
      %397 = vmatpush1.msra.mxu0 0.0
      %398 = vmatprep.subr.mxu0 0.0
      %399 = vmatpush1.msra.mxu0 0.0
      %400 = vmatprep.subr.mxu0 0.0
      %401 = vmatpush1.msra.mxu0 0.0
      %402 = vmatprep.subr.mxu0 0.0
      %403 = vmatpush1.msra.mxu0 0.0
      %404 = vmatprep.subr.mxu0 0.0
      %405 = vmatpush1.msra.mxu0 0.0
      %406 = vmatprep.subr.mxu0 0.0
      %407 = vmatpush1.msra.mxu0 0.0
      %408 = vmatprep.subr.mxu0 0.0
      %409 = vmatpush1.msra.mxu0 0.0
      %410 = vmatprep.subr.mxu0 0.0
      %411 = vmatpush1.msra.mxu0 0.0
      %412 = vmatprep.subr.mxu0 0.0
      %413 = vmatpush1.msra.mxu0 0.0
      %414 = vmatprep.subr.mxu0 0.0
      %415 = vmatpush1.msra.mxu0 0.0
      %416 = vmatprep.mubr.f32.mxu0 0.0
      %417 = vmatmul.mubr.f32.gmra.mrb[0].mxu0 %v210
      %v418 = vpop.f32.mrb[0].mxu0
      %v419 = vadd.f32 %v279, %v418
      %v420 = vpop.f32.mrb[0].mxu0
      %v421 = vadd.f32 %v279, %v420
      %422 = vdwg.mxu0
      %423 = vst [vmem:[%s208] sm:$0xff] %v348
      %424 = vst [vmem:[%s208 + $0x8] sm:$0xff] %v350
      %425 = vst [vmem:[%s208 + $0x10] sm:$0xff] %v419
      %426 = vst [vmem:[%s208 + $0x18] sm:$0xff] %v421
      %s427 = smul.u32 4, %s19
      %p428 = scmp.lt.s32.totalorder %s18, 1
      %s429 = scalar_select %p428, %s18, 1
      %p430 = scmp.lt.s32.totalorder %s427, 3
      %s431 = scalar_select %p430, %s427, 3
      %s432 = smul.addr %s429, 4
      %s433 = sadd.s32 %s431, %s432
      %s434 = smul.addr %s433, 8
      %s435 = scalar_lea.vmem %s3, %s434
      // Predicated region
      $region33: #{decoder_block_forward.4} parent=31 // pred_check
        %p436 = pneg %p116
      $region34: #{decoder_block_forward.4} parent=31 // pred_check_branch
        %438 = sbr.rel (%p436) target = $region36
      $region35: #{decoder_block_forward.4} parent=31 // pred_region
        %s439 = smul.u32 4, %s19
      $region36: #{decoder_block_forward.4} parent=31 // pred_fallthru
        _
    $region32: #{decoder_block_forward.4} parent=5 // pred_fallthru
      _
    %p440 = scmp.le.s32.totalorder 2, %s9
    // Predicated region
    $region37: #{decoder_block_forward.4} parent=5 // pred_check
      %p441 = pneg %p440
    $region38: #{decoder_block_forward.4} parent=5 // pred_check_branch
      %443 = sbr.rel (%p441) target = $region40
    $region39: #{decoder_block_forward.4} parent=5 // pred_region
      %s444 = ssub.s32 %s9, 2
      // Predicated region
      $region41: #{decoder_block_forward.4} parent=39 // pred_check
        %p445 = pneg %p122
      $region42: #{decoder_block_forward.4} parent=39 // pred_check_branch
        %447 = sbr.rel (%p445) target = $region44
      $region43: #{decoder_block_forward.4} parent=39 // pred_region
        %s448 = smul.u32 4, %s21
        %p449 = scmp.lt.s32.totalorder %s20, 1
        %s450 = scalar_select %p449, %s20, 1
        %p451 = scmp.lt.s32.totalorder %s448, 3
        %s452 = scalar_select %p451, %s448, 3
        %s453 = smul.addr %s450, 4
        %s454 = sadd.s32 %s452, %s453
        %s455 = smul.addr %s454, 8
        %s456 = scalar_lea.vmem %s3, %s455
      $region44: #{decoder_block_forward.4} parent=39 // pred_fallthru
        _
    $region40: #{decoder_block_forward.4} parent=5 // pred_fallthru
      _
  $region6: #{decoder_block_forward.4} parent=0 // loop_footer
    %s13 = sadd.s32 1, %s9
  $region7: #{decoder_block_forward.4} parent=0 // loop_footer_branch
    %8 = sbr.rel target = $region3
  $region8: #{decoder_block_forward.4} parent=0 // loop_exit
    _

// kernel: decoder_block_forward.5
$region0: #{decoder_block_forward.5}
  #allocation0 [shape = 'u32[]', space=smem, size = 0x4, offset = 0x4, fixed_abs, tag = 'smem constant byte address 0x4 - core index']
  #allocation1 [shape = 'u32[144,128]{1,0:T(1,128)}', space=vmem, size = 0x12000, scoped, tag = 'internal scratch']
  %s0 = inlined_call_operand.vmem [shape: f32[8,1024], index: 0, kind: input, shape index: {}]
  %s1 = inlined_call_operand.vmem [shape: f32[16,1024], index: 1, kind: output, shape index: {}]
  %s2 = sld [smem:[#allocation0]]
  $region56: #{decoder_block_forward.5} parent=0
    _
  %s4 = ssub.s32 1, %s2
  %s5 = scalar_select 0, %s4, %s2
  $region1: #{decoder_block_forward.5} parent=0
    #allocation2 [shape = 'u8[65536]{0}', space=vmem, size = 0x10000, scoped, tag = 'output window, operand 0']
    loop: start=0, step=1, limit=4
    $region2: #{decoder_block_forward.5} parent=1 // loop_pre_header
      _
    $region3: #{decoder_block_forward.5} parent=1 // loop_header
      %s7 = sphi 0, %s11
      %p8 = scmp.ge.s32.totalorder %s7, 4
      %s17 = sphi 0, %s19
      %s20 = sphi 0, %s17
      %s21 = sphi 0, %s20
      %s37 = sphi 0, %s21
      %s43 = sphi 0, %s45
      %s46 = sphi 0, %s43
      %s47 = sphi 0, %s46
      %s63 = sphi 0, %s47
    $region4: #{decoder_block_forward.5} parent=1 // loop_header_branch
      %10 = sbr.rel (%p8) target = $region8
    $region5: #{decoder_block_forward.5} parent=1 // loop_body
      %s12 = ssub.s32 %s7, 1
      %s13 = ssub.s32 %s7, 2
      %s14 = sadd.s32 %s7, 1
      %s15 = ssub.s32 %s7, %s14
      %p16 = scmp.eq.s32.totalorder %s15, 0
      %s18 = sadd.s32 %s17, 1
      %s19 = scalar_select %p16, %s17, %s18
      %p22 = pneg %p16
      %p23 = scmp.eq.s32.totalorder %s7, 1
      %p24 = por %p22, %p23
      %p25 = scmp.ne.s32.totalorder %s17, %s20
      %p26 = scmp.eq.s32.totalorder %s7, 0
      %p27 = por %p25, %p26
      %p28 = scmp.ne.s32.totalorder %s17, %s20
      %p29 = scmp.eq.s32.totalorder %s12, 1
      %p30 = por %p28, %p29
      %p31 = scmp.ne.s32.totalorder %s20, %s21
      %p32 = scmp.eq.s32.totalorder %s12, 0
      %p33 = por %p31, %p32
      %p34 = scmp.ne.s32.totalorder %s20, %s21
      %p35 = scmp.eq.s32.totalorder %s13, 1
      %p36 = por %p34, %p35
      %p38 = scmp.ne.s32.totalorder %s21, %s37
      %p39 = scmp.eq.s32.totalorder %s13, 0
      %p40 = por %p38, %p39
      %s41 = ssub.s32 %s7, %s14
      %p42 = scmp.eq.s32.totalorder %s41, 0
      %s44 = sadd.s32 %s43, 1
      %s45 = scalar_select %p42, %s43, %s44
      %p48 = pneg %p42
      %p49 = scmp.eq.s32.totalorder %s7, 1
      %p50 = por %p48, %p49
      %p51 = scmp.ne.s32.totalorder %s43, %s46
      %p52 = scmp.eq.s32.totalorder %s7, 0
      %p53 = por %p51, %p52
      %p54 = scmp.ne.s32.totalorder %s43, %s46
      %p55 = scmp.eq.s32.totalorder %s12, 1
      %p56 = por %p54, %p55
      %p57 = scmp.ne.s32.totalorder %s46, %s47
      %p58 = scmp.eq.s32.totalorder %s12, 0
      %p59 = por %p57, %p58
      %p60 = scmp.ne.s32.totalorder %s46, %s47
      %p61 = scmp.eq.s32.totalorder %s13, 1
      %p62 = por %p60, %p61
      %p64 = scmp.ne.s32.totalorder %s47, %s63
      %p65 = scmp.eq.s32.totalorder %s13, 0
      %p66 = por %p64, %p65
      %p67 = scmp.le.s32.totalorder 1, %s7
      %p68 = scmp.lt.s32.totalorder %s7, 3
      %p69 = pnand %p67, %p68
      %p70 = pneg %p69
      // Predicated region
      $region9: #{decoder_block_forward.5} parent=5 // pred_check
        _
      $region10: #{decoder_block_forward.5} parent=5 // pred_check_branch
        %72 = sbr.rel (%p69) target = $region12
      $region11: #{decoder_block_forward.5} parent=5 // pred_region
        %s73 = ssub.s32 %s7, 1
      $region12: #{decoder_block_forward.5} parent=5 // pred_fallthru
        _
      %p74 = scmp.lt.s32.totalorder %s7, 2
      // Predicated region
      $region13: #{decoder_block_forward.5} parent=5 // pred_check
        %p75 = pneg %p74
      $region14: #{decoder_block_forward.5} parent=5 // pred_check_branch
        %77 = sbr.rel (%p75) target = $region16
      $region15: #{decoder_block_forward.5} parent=5 // pred_region
        // Predicated region
        $region17: #{decoder_block_forward.5} parent=15 // pred_check
          %p78 = pneg %p27
        $region18: #{decoder_block_forward.5} parent=15 // pred_check_branch
          %80 = sbr.rel (%p78) target = $region20
        $region19: #{decoder_block_forward.5} parent=15 // pred_region
          %s81 = smul.u32 4, %s7
          %p82 = scmp.lt.s32.totalorder %s81, 7
          %s83 = scalar_select %p82, %s81, 7
          %s84 = smul.addr %s83, 8
          %s85 = scalar_lea.vmem %s0, %s84
          %s86 = smul.u32 4, %s7
        $region20: #{decoder_block_forward.5} parent=15 // pred_fallthru
          _
      $region16: #{decoder_block_forward.5} parent=5 // pred_fallthru
        _
      %p87 = scmp.le.s32.totalorder 1, %s7
      %p88 = scmp.lt.s32.totalorder %s7, 3
      %p89 = pnand %p87, %p88
      %p90 = pneg %p89
      // Predicated region
      $region21: #{decoder_block_forward.5} parent=5 // pred_check
        _
      $region22: #{decoder_block_forward.5} parent=5 // pred_check_branch
        %92 = sbr.rel (%p89) target = $region24
      $region23: #{decoder_block_forward.5} parent=5 // pred_region
        %s93 = ssub.s32 %s7, 1
        %s94 = smul.u32 4, %s12
        %p95 = scmp.lt.s32.totalorder %s94, 7
        %s96 = scalar_select %p95, %s94, 7
        %s97 = smul.addr %s96, 8
        %s98 = scalar_lea.vmem %s0, %s97
        %p99 = pneg %p33
        %p100 = pneg %p30
        %p101 = pneg %p59
        %p102 = pneg %p56
        %s103 = sand.u32 %s46, 1
        %s104 = sand.u32 %s46, 1
        %s105 = smul.addr %s104, 64
        %s106 = scalar_lea.vmem [#allocation2], %s105
        %s107 = smul.u32 4, %s12
        %p108 = scmp.lt.s32.totalorder %s107, 7
        %s109 = scalar_select %p108, %s107, 7
        %s110 = smul.addr %s109, 8
        %s111 = scalar_lea.vmem %s0, %s110
        %s112 = smul.u32 4, %s12
        %s113 = smul.u32 4, %s12
        %v114 = vld [vmem:[%s111] sm:$0xff]
        %v115 = vld [vmem:[%s111 + $0x8] sm:$0xff]
        %v116 = vld [vmem:[%s111 + $0x10] sm:$0xff]
        %v117 = vld [vmem:[%s111 + $0x18] sm:$0xff]
        %v122 = vrot.slane %v114, 7
        %v123 = vrot.slane %v115, 7
        %v124 = vrot.slane %v116, 7
        %v125 = vrot.slane %v117, 7
        %v130 = vsub.f32 %v114, %v122
        %v131 = vsub.f32 %v115, %v123
        %v132 = vsub.f32 %v116, %v124
        %v133 = vsub.f32 %v117, %v125
        %v134 = vmul.f32 %v130, 0.46666667
        %v135 = vmul.f32 %v131, 0.46666667
        %v136 = vmul.f32 %v132, 0.46666667
        %v137 = vmul.f32 %v133, 0.46666667
        %v142 = vrot.slane %v134, 1
        %v143 = vrot.slane %v135, 1
        %v144 = vrot.slane %v136, 1
        %v145 = vrot.slane %v137, 1
        %v150 = vadd.f32 %v114, %v142
        %v151 = vadd.f32 %v115, %v143
        %v152 = vadd.f32 %v116, %v144
        %v153 = vadd.f32 %v117, %v145
        %v154 = vmul.f32 %v130, 0.93333334
        %v155 = vmul.f32 %v131, 0.93333334
        %v156 = vmul.f32 %v132, 0.93333334
        %v157 = vmul.f32 %v133, 0.93333334
        %v162 = vrot.slane %v154, 1
        %v163 = vrot.slane %v155, 1
        %v164 = vrot.slane %v156, 1
        %v165 = vrot.slane %v157, 1
        %v170 = vadd.f32 %v114, %v162
        %v171 = vadd.f32 %v115, %v163
        %v172 = vadd.f32 %v116, %v164
        %v173 = vadd.f32 %v117, %v165
        %v174 = vmul.f32 %v130, 0.4
        %v175 = vmul.f32 %v131, 0.4
        %v176 = vmul.f32 %v132, 0.4
        %v177 = vmul.f32 %v133, 0.4
        %v182 = vrot.slane %v174, 1
        %v183 = vrot.slane %v175, 1
        %v184 = vrot.slane %v176, 1
        %v185 = vrot.slane %v177, 1
        %v190 = vadd.f32 %v114, %v182
        %v191 = vadd.f32 %v115, %v183
        %v192 = vadd.f32 %v116, %v184
        %v193 = vadd.f32 %v117, %v185
        %v194 = vmul.f32 %v130, 0.8666667
        %v195 = vmul.f32 %v131, 0.8666667
        %v196 = vmul.f32 %v132, 0.8666667
        %v197 = vmul.f32 %v133, 0.8666667
        %v202 = vrot.slane %v194, 1
        %v203 = vrot.slane %v195, 1
        %v204 = vrot.slane %v196, 1
        %v205 = vrot.slane %v197, 1
        %v210 = vadd.f32 %v114, %v202
        %v211 = vadd.f32 %v115, %v203
        %v212 = vadd.f32 %v116, %v204
        %v213 = vadd.f32 %v117, %v205
        %v214 = vmul.f32 %v130, 0.33333334
        %v215 = vmul.f32 %v131, 0.33333334
        %v216 = vmul.f32 %v132, 0.33333334
        %v217 = vmul.f32 %v133, 0.33333334
        %v222 = vrot.slane %v214, 1
        %v223 = vrot.slane %v215, 1
        %v224 = vrot.slane %v216, 1
        %v225 = vrot.slane %v217, 1
        %v230 = vadd.f32 %v114, %v222
        %v231 = vadd.f32 %v115, %v223
        %v232 = vadd.f32 %v116, %v224
        %v233 = vadd.f32 %v117, %v225
        %v234 = vmul.f32 %v130, 0.8
        %v235 = vmul.f32 %v131, 0.8
        %v236 = vmul.f32 %v132, 0.8
        %v237 = vmul.f32 %v133, 0.8
        %v242 = vrot.slane %v234, 1
        %v243 = vrot.slane %v235, 1
        %v244 = vrot.slane %v236, 1
        %v245 = vrot.slane %v237, 1
        %v250 = vadd.f32 %v114, %v242
        %v251 = vadd.f32 %v115, %v243
        %v252 = vadd.f32 %v116, %v244
        %v253 = vadd.f32 %v117, %v245
        %v254 = vmul.f32 %v130, 0.26666668
        %v255 = vmul.f32 %v131, 0.26666668
        %v256 = vmul.f32 %v132, 0.26666668
        %v257 = vmul.f32 %v133, 0.26666668
        %v262 = vrot.slane %v254, 1
        %v263 = vrot.slane %v255, 1
        %v264 = vrot.slane %v256, 1
        %v265 = vrot.slane %v257, 1
        %v270 = vadd.f32 %v114, %v262
        %v271 = vadd.f32 %v115, %v263
        %v272 = vadd.f32 %v116, %v264
        %v273 = vadd.f32 %v117, %v265
        %v274 = vmul.f32 %v130, 0.73333335
        %v275 = vmul.f32 %v131, 0.73333335
        %v276 = vmul.f32 %v132, 0.73333335
        %v277 = vmul.f32 %v133, 0.73333335
        %v282 = vrot.slane %v274, 1
        %v283 = vrot.slane %v275, 1
        %v284 = vrot.slane %v276, 1
        %v285 = vrot.slane %v277, 1
        %v290 = vadd.f32 %v114, %v282
        %v291 = vadd.f32 %v115, %v283
        %v292 = vadd.f32 %v116, %v284
        %v293 = vadd.f32 %v117, %v285
        %v294 = vmul.f32 %v130, 0.2
        %v295 = vmul.f32 %v131, 0.2
        %v296 = vmul.f32 %v132, 0.2
        %v297 = vmul.f32 %v133, 0.2
        %v302 = vrot.slane %v294, 1
        %v303 = vrot.slane %v295, 1
        %v304 = vrot.slane %v296, 1
        %v305 = vrot.slane %v297, 1
        %v310 = vadd.f32 %v114, %v302
        %v311 = vadd.f32 %v115, %v303
        %v312 = vadd.f32 %v116, %v304
        %v313 = vadd.f32 %v117, %v305
        %v314 = vmul.f32 %v130, 0.6666667
        %v315 = vmul.f32 %v131, 0.6666667
        %v316 = vmul.f32 %v132, 0.6666667
        %v317 = vmul.f32 %v133, 0.6666667
        %v322 = vrot.slane %v314, 1
        %v323 = vrot.slane %v315, 1
        %v324 = vrot.slane %v316, 1
        %v325 = vrot.slane %v317, 1
        %v330 = vadd.f32 %v114, %v322
        %v331 = vadd.f32 %v115, %v323
        %v332 = vadd.f32 %v116, %v324
        %v333 = vadd.f32 %v117, %v325
        %v334 = vmul.f32 %v130, 0.13333334
        %v335 = vmul.f32 %v131, 0.13333334
        %v336 = vmul.f32 %v132, 0.13333334
        %v337 = vmul.f32 %v133, 0.13333334
        %v342 = vrot.slane %v334, 1
        %v343 = vrot.slane %v335, 1
        %v344 = vrot.slane %v336, 1
        %v345 = vrot.slane %v337, 1
        %v350 = vadd.f32 %v114, %v342
        %v351 = vadd.f32 %v115, %v343
        %v352 = vadd.f32 %v116, %v344
        %v353 = vadd.f32 %v117, %v345
        %v354 = vmul.f32 %v130, 0.6
        %v355 = vmul.f32 %v131, 0.6
        %v356 = vmul.f32 %v132, 0.6
        %v357 = vmul.f32 %v133, 0.6
        %v362 = vrot.slane %v354, 1
        %v363 = vrot.slane %v355, 1
        %v364 = vrot.slane %v356, 1
        %v365 = vrot.slane %v357, 1
        %v370 = vadd.f32 %v114, %v362
        %v371 = vadd.f32 %v115, %v363
        %v372 = vadd.f32 %v116, %v364
        %v373 = vadd.f32 %v117, %v365
        %v374 = vmul.f32 %v130, 0.06666667
        %v375 = vmul.f32 %v131, 0.06666667
        %v376 = vmul.f32 %v132, 0.06666667
        %v377 = vmul.f32 %v133, 0.06666667
        %v382 = vrot.slane %v374, 1
        %v383 = vrot.slane %v375, 1
        %v384 = vrot.slane %v376, 1
        %v385 = vrot.slane %v377, 1
        %v390 = vadd.f32 %v114, %v382
        %v391 = vadd.f32 %v115, %v383
        %v392 = vadd.f32 %v116, %v384
        %v393 = vadd.f32 %v117, %v385
        %v394 = vmul.f32 %v130, 0.53333336
        %v395 = vmul.f32 %v131, 0.53333336
        %v396 = vmul.f32 %v132, 0.53333336
        %v397 = vmul.f32 %v133, 0.53333336
        %v402 = vrot.slane %v394, 1
        %v403 = vrot.slane %v395, 1
        %v404 = vrot.slane %v396, 1
        %v405 = vrot.slane %v397, 1
        %v410 = vadd.f32 %v114, %v402
        %v411 = vadd.f32 %v115, %v403
        %v412 = vadd.f32 %v116, %v404
        %v413 = vadd.f32 %v117, %v405
        %v418 = vrot.slane %v150, 7
        %v419 = vrot.slane %v151, 7
        %v420 = vrot.slane %v152, 7
        %v421 = vrot.slane %v153, 7
        %v430 = vrot.slane %v170, 6
        %v431 = vrot.slane %v171, 6
        %v432 = vrot.slane %v172, 6
        %v433 = vrot.slane %v173, 6
        %v442 = vrot.slane %v190, 6
        %v443 = vrot.slane %v191, 6
        %v444 = vrot.slane %v192, 6
        %v445 = vrot.slane %v193, 6
        %v454 = vrot.slane %v210, 5
        %v455 = vrot.slane %v211, 5
        %v456 = vrot.slane %v212, 5
        %v457 = vrot.slane %v213, 5
        %v466 = vrot.slane %v230, 5
        %v467 = vrot.slane %v231, 5
        %v468 = vrot.slane %v232, 5
        %v469 = vrot.slane %v233, 5
        %v478 = vrot.slane %v250, 4
        %v479 = vrot.slane %v251, 4
        %v480 = vrot.slane %v252, 4
        %v481 = vrot.slane %v253, 4
        %v490 = vrot.slane %v270, 4
        %v491 = vrot.slane %v271, 4
        %v492 = vrot.slane %v272, 4
        %v493 = vrot.slane %v273, 4
        %v502 = vrot.slane %v290, 3
        %v503 = vrot.slane %v291, 3
        %v504 = vrot.slane %v292, 3
        %v505 = vrot.slane %v293, 3
        %v514 = vrot.slane %v310, 3
        %v515 = vrot.slane %v311, 3
        %v516 = vrot.slane %v312, 3
        %v517 = vrot.slane %v313, 3
        %v526 = vrot.slane %v330, 2
        %v527 = vrot.slane %v331, 2
        %v528 = vrot.slane %v332, 2
        %v529 = vrot.slane %v333, 2
        %v538 = vrot.slane %v350, 2
        %v539 = vrot.slane %v351, 2
        %v540 = vrot.slane %v352, 2
        %v541 = vrot.slane %v353, 2
        %v550 = vrot.slane %v370, 1
        %v551 = vrot.slane %v371, 1
        %v552 = vrot.slane %v372, 1
        %v553 = vrot.slane %v373, 1
        %v562 = vrot.slane %v390, 1
        %v563 = vrot.slane %v391, 1
        %v564 = vrot.slane %v392, 1
        %v565 = vrot.slane %v393, 1
        %vm570 = vcmask 1040384
        %v571 = vsel %vm570, %v114, %v418
        %v572 = vsel %vm570, %v115, %v419
        %v573 = vsel %vm570, %v116, %v420
        %v574 = vsel %vm570, %v117, %v421
        %vm575 = vcmask 1041408
        %v576 = vsel %vm575, %v571, %v430
        %v577 = vsel %vm575, %v572, %v431
        %v578 = vsel %vm575, %v573, %v432
        %v579 = vsel %vm575, %v574, %v433
        %vm580 = vcmask 1042432
        %v581 = vsel %vm580, %v576, %v442
        %v582 = vsel %vm580, %v577, %v443
        %v583 = vsel %vm580, %v578, %v444
        %v584 = vsel %vm580, %v579, %v445
        %vm585 = vcmask 1043456
        %v586 = vsel %vm585, %v581, %v454
        %v587 = vsel %vm585, %v582, %v455
        %v588 = vsel %vm585, %v583, %v456
        %v589 = vsel %vm585, %v584, %v457
        %vm590 = vcmask 1044480
        %v591 = vsel %vm590, %v586, %v466
        %v592 = vsel %vm590, %v587, %v467
        %v593 = vsel %vm590, %v588, %v468
        %v594 = vsel %vm590, %v589, %v469
        %vm595 = vcmask 1045504
        %v596 = vsel %vm595, %v591, %v478
        %v597 = vsel %vm595, %v592, %v479
        %v598 = vsel %vm595, %v593, %v480
        %v599 = vsel %vm595, %v594, %v481
        %vm600 = vcmask 1046528
        %v601 = vsel %vm600, %v596, %v490
        %v602 = vsel %vm600, %v597, %v491
        %v603 = vsel %vm600, %v598, %v492
        %v604 = vsel %vm600, %v599, %v493
        %v605 = vsel %vm570, %v502, %v514
        %v606 = vsel %vm570, %v503, %v515
        %v607 = vsel %vm570, %v504, %v516
        %v608 = vsel %vm570, %v505, %v517
        %v609 = vsel %vm575, %v605, %v526
        %v610 = vsel %vm575, %v606, %v527
        %v611 = vsel %vm575, %v607, %v528
        %v612 = vsel %vm575, %v608, %v529
        %v613 = vsel %vm580, %v609, %v538
        %v614 = vsel %vm580, %v610, %v539
        %v615 = vsel %vm580, %v611, %v540
        %v616 = vsel %vm580, %v612, %v541
        %v617 = vsel %vm585, %v613, %v550
        %v618 = vsel %vm585, %v614, %v551
        %v619 = vsel %vm585, %v615, %v552
        %v620 = vsel %vm585, %v616, %v553
        %v621 = vsel %vm590, %v617, %v562
        %v622 = vsel %vm590, %v618, %v563
        %v623 = vsel %vm590, %v619, %v564
        %v624 = vsel %vm590, %v620, %v565
        %v625 = vsel %vm595, %v621, %v410
        %v626 = vsel %vm595, %v622, %v411
        %v627 = vsel %vm595, %v623, %v412
        %v628 = vsel %vm595, %v624, %v413
        %v629 = vsel %vm600, %v625, %v114
        %v630 = vsel %vm600, %v626, %v115
        %v631 = vsel %vm600, %v627, %v116
        %v632 = vsel %vm600, %v628, %v117
        %633 = vst [vmem:[%s106] sm:$0xff] %v601
        %634 = vst [vmem:[%s106 + $0x8] sm:$0xff] %v602
        %635 = vst [vmem:[%s106 + $0x10] sm:$0xff] %v603
        %636 = vst [vmem:[%s106 + $0x18] sm:$0xff] %v604
        %637 = vst [vmem:[%s106 + $0x20] sm:$0xff] %v629
        %638 = vst [vmem:[%s106 + $0x28] sm:$0xff] %v630
        %639 = vst [vmem:[%s106 + $0x30] sm:$0xff] %v631
        %640 = vst [vmem:[%s106 + $0x38] sm:$0xff] %v632
        %s641 = sand.u32 %s46, 1
        %s642 = sand.u32 %s46, 1
        %s643 = smul.addr %s642, 64
        %s644 = scalar_lea.vmem [#allocation2], %s643
        // Predicated region
        $region25: #{decoder_block_forward.5} parent=23 // pred_check
          %p645 = pneg %p56
        $region26: #{decoder_block_forward.5} parent=23 // pred_check_branch
          %647 = sbr.rel (%p645) target = $region28
        $region27: #{decoder_block_forward.5} parent=23 // pred_region
          %s648 = smul.u32 4, %s12
          %s649 = smul.addr %s648, 8
          %s650 = scalar_lea.vmem %s1, %s649
          // Predicated region
          $region29: #{decoder_block_forward.5} parent=27 // pred_check
            _
          $region30: #{decoder_block_forward.5} parent=27 // pred_check_branch
            %652 = sbr.rel (0) target = $region32
          $region31: #{decoder_block_forward.5} parent=27 // pred_region
            // Predicated region
            $region33: #{decoder_block_forward.5} parent=31 // pred_check
              _
            $region34: #{decoder_block_forward.5} parent=31 // pred_check_branch
              %654 = sbr.rel (0) target = $region36
            $region35: #{decoder_block_forward.5} parent=31 // pred_region
              loop: start=0, step=1, limit=1
              $region37: #{decoder_block_forward.5} parent=35 // loop_pre_header
                _
              $region38: #{decoder_block_forward.5} parent=35 // loop_header
                %s656 = sphi 0, %s660
                %p657 = scmp.ge.s32.totalorder %s656, 1
                %s661 = sphi %s644, %s644
                %s662 = sphi %s650, %s650
              $region39: #{decoder_block_forward.5} parent=35 // loop_header_branch
                %659 = sbr.rel (%p657) target = $region43
              $region40: #{decoder_block_forward.5} parent=35 // loop_body
                %v663 = vld [vmem:[%s661] sm:$0xff]
                %664 = vst [vmem:[%s662] sm:$0xff] %v663
                %v665 = vld [vmem:[%s661 + $0x8] sm:$0xff]
                %666 = vst [vmem:[%s662 + $0x8] sm:$0xff] %v665
                %v667 = vld [vmem:[%s661 + $0x10] sm:$0xff]
                %668 = vst [vmem:[%s662 + $0x10] sm:$0xff] %v667
                %v669 = vld [vmem:[%s661 + $0x18] sm:$0xff]
                %670 = vst [vmem:[%s662 + $0x18] sm:$0xff] %v669
                %v671 = vld [vmem:[%s661 + $0x20] sm:$0xff]
                %672 = vst [vmem:[%s662 + $0x40] sm:$0xff] %v671
                %v673 = vld [vmem:[%s661 + $0x28] sm:$0xff]
                %674 = vst [vmem:[%s662 + $0x48] sm:$0xff] %v673
                %v675 = vld [vmem:[%s661 + $0x30] sm:$0xff]
                %676 = vst [vmem:[%s662 + $0x50] sm:$0xff] %v675
                %v677 = vld [vmem:[%s661 + $0x38] sm:$0xff]
                %678 = vst [vmem:[%s662 + $0x58] sm:$0xff] %v677
              $region41: #{decoder_block_forward.5} parent=35 // loop_footer
                %s660 = sadd.s32 1, %s656
              $region42: #{decoder_block_forward.5} parent=35 // loop_footer_branch
                %655 = sbr.rel target = $region38
              $region43: #{decoder_block_forward.5} parent=35 // loop_exit
                _
            $region36: #{decoder_block_forward.5} parent=31 // pred_fallthru
              _
            // Predicated region
            $region44: #{decoder_block_forward.5} parent=31 // pred_check
              _
            $region45: #{decoder_block_forward.5} parent=31 // pred_check_branch
              %680 = sbr.rel target = $region47
            $region46: #{decoder_block_forward.5} parent=31 // pred_region
              _
            $region47: #{decoder_block_forward.5} parent=31 // pred_fallthru
              _
          $region32: #{decoder_block_forward.5} parent=27 // pred_fallthru
            _
          %681 = vnop
        $region28: #{decoder_block_forward.5} parent=23 // pred_fallthru
          _
      $region24: #{decoder_block_forward.5} parent=5 // pred_fallthru
        _
      %p682 = scmp.le.s32.totalorder 2, %s7
      // Predicated region
      $region48: #{decoder_block_forward.5} parent=5 // pred_check
        %p683 = pneg %p682
      $region49: #{decoder_block_forward.5} parent=5 // pred_check_branch
        %685 = sbr.rel (%p683) target = $region51
      $region50: #{decoder_block_forward.5} parent=5 // pred_region
        %s686 = ssub.s32 %s7, 2
        // Predicated region
        $region52: #{decoder_block_forward.5} parent=50 // pred_check
          %p687 = pneg %p62
        $region53: #{decoder_block_forward.5} parent=50 // pred_check_branch
          %689 = sbr.rel (%p687) target = $region55
        $region54: #{decoder_block_forward.5} parent=50 // pred_region
          %s690 = sand.u32 %s47, 1
          %s691 = sand.u32 %s47, 1
          %s692 = smul.addr %s691, 64
          %s693 = scalar_lea.vmem [#allocation2], %s692
        $region55: #{decoder_block_forward.5} parent=50 // pred_fallthru
          _
      $region51: #{decoder_block_forward.5} parent=5 // pred_fallthru
        _
    $region6: #{decoder_block_forward.5} parent=1 // loop_footer
      %s11 = sadd.s32 1, %s7
    $region7: #{decoder_block_forward.5} parent=1 // loop_footer_branch
      %6 = sbr.rel target = $region3
    $region8: #{decoder_block_forward.5} parent=1 // loop_exit
      _

// kernel: decoder_block_forward.6
$region0: #{decoder_block_forward.6}
  #allocation0 [shape = 'u32[]', space=smem, size = 0x4, offset = 0x4, fixed_abs, tag = 'smem constant byte address 0x4 - core index']
  #allocation1 [shape = 'u32[144,128]{1,0:T(1,128)}', space=vmem, size = 0x12000, scoped, tag = 'internal scratch']
  %s0 = inlined_call_operand.vmem [shape: f32[8,2048], index: 0, kind: input, shape index: {}]
  %s1 = inlined_call_operand.vmem [shape: f32[16,2048], index: 1, kind: output, shape index: {}]
  %s2 = sld [smem:[#allocation0]]
  $region56: #{decoder_block_forward.6} parent=0
    _
  %s4 = ssub.s32 1, %s2
  %s5 = scalar_select 0, %s4, %s2
  $region1: #{decoder_block_forward.6} parent=0
    #allocation2 [shape = 'u8[65536]{0}', space=vmem, size = 0x10000, scoped, tag = 'output window, operand 0']
    loop: start=0, step=1, limit=6
    $region2: #{decoder_block_forward.6} parent=1 // loop_pre_header
      _
    $region3: #{decoder_block_forward.6} parent=1 // loop_header
      %s7 = sphi 0, %s11
      %p8 = scmp.ge.s32.totalorder %s7, 6
      %s17 = sphi 0, %s19
      %s20 = sphi 0, %s17
      %s21 = sphi 0, %s20
      %s37 = sphi 0, %s21
      %s43 = sphi 0, %s45
      %s46 = sphi 0, %s43
      %s47 = sphi 0, %s46
      %s63 = sphi 0, %s47
    $region4: #{decoder_block_forward.6} parent=1 // loop_header_branch
      %10 = sbr.rel (%p8) target = $region8
    $region5: #{decoder_block_forward.6} parent=1 // loop_body
      %s12 = ssub.s32 %s7, 1
      %s13 = ssub.s32 %s7, 2
      %s14 = sadd.s32 %s7, 1
      %s15 = ssub.s32 %s7, %s14
      %p16 = scmp.eq.s32.totalorder %s15, 0
      %s18 = sadd.s32 %s17, 1
      %s19 = scalar_select %p16, %s17, %s18
      %p22 = pneg %p16
      %p23 = scmp.eq.s32.totalorder %s7, 3
      %p24 = por %p22, %p23
      %p25 = scmp.ne.s32.totalorder %s17, %s20
      %p26 = scmp.eq.s32.totalorder %s7, 0
      %p27 = por %p25, %p26
      %p28 = scmp.ne.s32.totalorder %s17, %s20
      %p29 = scmp.eq.s32.totalorder %s12, 3
      %p30 = por %p28, %p29
      %p31 = scmp.ne.s32.totalorder %s20, %s21
      %p32 = scmp.eq.s32.totalorder %s12, 0
      %p33 = por %p31, %p32
      %p34 = scmp.ne.s32.totalorder %s20, %s21
      %p35 = scmp.eq.s32.totalorder %s13, 3
      %p36 = por %p34, %p35
      %p38 = scmp.ne.s32.totalorder %s21, %s37
      %p39 = scmp.eq.s32.totalorder %s13, 0
      %p40 = por %p38, %p39
      %s41 = ssub.s32 %s7, %s14
      %p42 = scmp.eq.s32.totalorder %s41, 0
      %s44 = sadd.s32 %s43, 1
      %s45 = scalar_select %p42, %s43, %s44
      %p48 = pneg %p42
      %p49 = scmp.eq.s32.totalorder %s7, 3
      %p50 = por %p48, %p49
      %p51 = scmp.ne.s32.totalorder %s43, %s46
      %p52 = scmp.eq.s32.totalorder %s7, 0
      %p53 = por %p51, %p52
      %p54 = scmp.ne.s32.totalorder %s43, %s46
      %p55 = scmp.eq.s32.totalorder %s12, 3
      %p56 = por %p54, %p55
      %p57 = scmp.ne.s32.totalorder %s46, %s47
      %p58 = scmp.eq.s32.totalorder %s12, 0
      %p59 = por %p57, %p58
      %p60 = scmp.ne.s32.totalorder %s46, %s47
      %p61 = scmp.eq.s32.totalorder %s13, 3
      %p62 = por %p60, %p61
      %p64 = scmp.ne.s32.totalorder %s47, %s63
      %p65 = scmp.eq.s32.totalorder %s13, 0
      %p66 = por %p64, %p65
      %p67 = scmp.le.s32.totalorder 1, %s7
      %p68 = scmp.lt.s32.totalorder %s7, 5
      %p69 = pnand %p67, %p68
      %p70 = pneg %p69
      // Predicated region
      $region9: #{decoder_block_forward.6} parent=5 // pred_check
        _
      $region10: #{decoder_block_forward.6} parent=5 // pred_check_branch
        %72 = sbr.rel (%p69) target = $region12
      $region11: #{decoder_block_forward.6} parent=5 // pred_region
        %s73 = ssub.s32 %s7, 1
      $region12: #{decoder_block_forward.6} parent=5 // pred_fallthru
        _
      %p74 = scmp.lt.s32.totalorder %s7, 4
      // Predicated region
      $region13: #{decoder_block_forward.6} parent=5 // pred_check
        %p75 = pneg %p74
      $region14: #{decoder_block_forward.6} parent=5 // pred_check_branch
        %77 = sbr.rel (%p75) target = $region16
      $region15: #{decoder_block_forward.6} parent=5 // pred_region
        // Predicated region
        $region17: #{decoder_block_forward.6} parent=15 // pred_check
          %p78 = pneg %p27
        $region18: #{decoder_block_forward.6} parent=15 // pred_check_branch
          %80 = sbr.rel (%p78) target = $region20
        $region19: #{decoder_block_forward.6} parent=15 // pred_region
          %s81 = smul.u32 4, %s7
          %p82 = scmp.lt.s32.totalorder %s81, 15
          %s83 = scalar_select %p82, %s81, 15
          %s84 = smul.addr %s83, 8
          %s85 = scalar_lea.vmem %s0, %s84
          %s86 = smul.u32 4, %s7
        $region20: #{decoder_block_forward.6} parent=15 // pred_fallthru
          _
      $region16: #{decoder_block_forward.6} parent=5 // pred_fallthru
        _
      %p87 = scmp.le.s32.totalorder 1, %s7
      %p88 = scmp.lt.s32.totalorder %s7, 5
      %p89 = pnand %p87, %p88
      %p90 = pneg %p89
      // Predicated region
      $region21: #{decoder_block_forward.6} parent=5 // pred_check
        _
      $region22: #{decoder_block_forward.6} parent=5 // pred_check_branch
        %92 = sbr.rel (%p89) target = $region24
      $region23: #{decoder_block_forward.6} parent=5 // pred_region
        %s93 = ssub.s32 %s7, 1
        %s94 = smul.u32 4, %s12
        %p95 = scmp.lt.s32.totalorder %s94, 15
        %s96 = scalar_select %p95, %s94, 15
        %s97 = smul.addr %s96, 8
        %s98 = scalar_lea.vmem %s0, %s97
        %p99 = pneg %p33
        %p100 = pneg %p30
        %p101 = pneg %p59
        %p102 = pneg %p56
        %s103 = sand.u32 %s46, 1
        %s104 = sand.u32 %s46, 1
        %s105 = smul.addr %s104, 64
        %s106 = scalar_lea.vmem [#allocation2], %s105
        %s107 = smul.u32 4, %s12
        %p108 = scmp.lt.s32.totalorder %s107, 15
        %s109 = scalar_select %p108, %s107, 15
        %s110 = smul.addr %s109, 8
        %s111 = scalar_lea.vmem %s0, %s110
        %s112 = smul.u32 4, %s12
        %s113 = smul.u32 4, %s12
        %v114 = vld [vmem:[%s111] sm:$0xff]
        %v115 = vld [vmem:[%s111 + $0x8] sm:$0xff]
        %v116 = vld [vmem:[%s111 + $0x10] sm:$0xff]
        %v117 = vld [vmem:[%s111 + $0x18] sm:$0xff]
        %v122 = vrot.slane %v114, 7
        %v123 = vrot.slane %v115, 7
        %v124 = vrot.slane %v116, 7
        %v125 = vrot.slane %v117, 7
        %v130 = vsub.f32 %v114, %v122
        %v131 = vsub.f32 %v115, %v123
        %v132 = vsub.f32 %v116, %v124
        %v133 = vsub.f32 %v117, %v125
        %v134 = vmul.f32 %v130, 0.46666667
        %v135 = vmul.f32 %v131, 0.46666667
        %v136 = vmul.f32 %v132, 0.46666667
        %v137 = vmul.f32 %v133, 0.46666667
        %v142 = vrot.slane %v134, 1
        %v143 = vrot.slane %v135, 1
        %v144 = vrot.slane %v136, 1
        %v145 = vrot.slane %v137, 1
        %v150 = vadd.f32 %v114, %v142
        %v151 = vadd.f32 %v115, %v143
        %v152 = vadd.f32 %v116, %v144
        %v153 = vadd.f32 %v117, %v145
        %v154 = vmul.f32 %v130, 0.93333334
        %v155 = vmul.f32 %v131, 0.93333334
        %v156 = vmul.f32 %v132, 0.93333334
        %v157 = vmul.f32 %v133, 0.93333334
        %v162 = vrot.slane %v154, 1
        %v163 = vrot.slane %v155, 1
        %v164 = vrot.slane %v156, 1
        %v165 = vrot.slane %v157, 1
        %v170 = vadd.f32 %v114, %v162
        %v171 = vadd.f32 %v115, %v163
        %v172 = vadd.f32 %v116, %v164
        %v173 = vadd.f32 %v117, %v165
        %v174 = vmul.f32 %v130, 0.4
        %v175 = vmul.f32 %v131, 0.4
        %v176 = vmul.f32 %v132, 0.4
        %v177 = vmul.f32 %v133, 0.4
        %v182 = vrot.slane %v174, 1
        %v183 = vrot.slane %v175, 1
        %v184 = vrot.slane %v176, 1
        %v185 = vrot.slane %v177, 1
        %v190 = vadd.f32 %v114, %v182
        %v191 = vadd.f32 %v115, %v183
        %v192 = vadd.f32 %v116, %v184
        %v193 = vadd.f32 %v117, %v185
        %v194 = vmul.f32 %v130, 0.8666667
        %v195 = vmul.f32 %v131, 0.8666667
        %v196 = vmul.f32 %v132, 0.8666667
        %v197 = vmul.f32 %v133, 0.8666667
        %v202 = vrot.slane %v194, 1
        %v203 = vrot.slane %v195, 1
        %v204 = vrot.slane %v196, 1
        %v205 = vrot.slane %v197, 1
        %v210 = vadd.f32 %v114, %v202
        %v211 = vadd.f32 %v115, %v203
        %v212 = vadd.f32 %v116, %v204
        %v213 = vadd.f32 %v117, %v205
        %v214 = vmul.f32 %v130, 0.33333334
        %v215 = vmul.f32 %v131, 0.33333334
        %v216 = vmul.f32 %v132, 0.33333334
        %v217 = vmul.f32 %v133, 0.33333334
        %v222 = vrot.slane %v214, 1
        %v223 = vrot.slane %v215, 1
        %v224 = vrot.slane %v216, 1
        %v225 = vrot.slane %v217, 1
        %v230 = vadd.f32 %v114, %v222
        %v231 = vadd.f32 %v115, %v223
        %v232 = vadd.f32 %v116, %v224
        %v233 = vadd.f32 %v117, %v225
        %v234 = vmul.f32 %v130, 0.8
        %v235 = vmul.f32 %v131, 0.8
        %v236 = vmul.f32 %v132, 0.8
        %v237 = vmul.f32 %v133, 0.8
        %v242 = vrot.slane %v234, 1
        %v243 = vrot.slane %v235, 1
        %v244 = vrot.slane %v236, 1
        %v245 = vrot.slane %v237, 1
        %v250 = vadd.f32 %v114, %v242
        %v251 = vadd.f32 %v115, %v243
        %v252 = vadd.f32 %v116, %v244
        %v253 = vadd.f32 %v117, %v245
        %v254 = vmul.f32 %v130, 0.26666668
        %v255 = vmul.f32 %v131, 0.26666668
        %v256 = vmul.f32 %v132, 0.26666668
        %v257 = vmul.f32 %v133, 0.26666668
        %v262 = vrot.slane %v254, 1
        %v263 = vrot.slane %v255, 1
        %v264 = vrot.slane %v256, 1
        %v265 = vrot.slane %v257, 1
        %v270 = vadd.f32 %v114, %v262
        %v271 = vadd.f32 %v115, %v263
        %v272 = vadd.f32 %v116, %v264
        %v273 = vadd.f32 %v117, %v265
        %v274 = vmul.f32 %v130, 0.73333335
        %v275 = vmul.f32 %v131, 0.73333335
        %v276 = vmul.f32 %v132, 0.73333335
        %v277 = vmul.f32 %v133, 0.73333335
        %v282 = vrot.slane %v274, 1
        %v283 = vrot.slane %v275, 1
        %v284 = vrot.slane %v276, 1
        %v285 = vrot.slane %v277, 1
        %v290 = vadd.f32 %v114, %v282
        %v291 = vadd.f32 %v115, %v283
        %v292 = vadd.f32 %v116, %v284
        %v293 = vadd.f32 %v117, %v285
        %v294 = vmul.f32 %v130, 0.2
        %v295 = vmul.f32 %v131, 0.2
        %v296 = vmul.f32 %v132, 0.2
        %v297 = vmul.f32 %v133, 0.2
        %v302 = vrot.slane %v294, 1
        %v303 = vrot.slane %v295, 1
        %v304 = vrot.slane %v296, 1
        %v305 = vrot.slane %v297, 1
        %v310 = vadd.f32 %v114, %v302
        %v311 = vadd.f32 %v115, %v303
        %v312 = vadd.f32 %v116, %v304
        %v313 = vadd.f32 %v117, %v305
        %v314 = vmul.f32 %v130, 0.6666667
        %v315 = vmul.f32 %v131, 0.6666667
        %v316 = vmul.f32 %v132, 0.6666667
        %v317 = vmul.f32 %v133, 0.6666667
        %v322 = vrot.slane %v314, 1
        %v323 = vrot.slane %v315, 1
        %v324 = vrot.slane %v316, 1
        %v325 = vrot.slane %v317, 1
        %v330 = vadd.f32 %v114, %v322
        %v331 = vadd.f32 %v115, %v323
        %v332 = vadd.f32 %v116, %v324
        %v333 = vadd.f32 %v117, %v325
        %v334 = vmul.f32 %v130, 0.13333334
        %v335 = vmul.f32 %v131, 0.13333334
        %v336 = vmul.f32 %v132, 0.13333334
        %v337 = vmul.f32 %v133, 0.13333334
        %v342 = vrot.slane %v334, 1
        %v343 = vrot.slane %v335, 1
        %v344 = vrot.slane %v336, 1
        %v345 = vrot.slane %v337, 1
        %v350 = vadd.f32 %v114, %v342
        %v351 = vadd.f32 %v115, %v343
        %v352 = vadd.f32 %v116, %v344
        %v353 = vadd.f32 %v117, %v345
        %v354 = vmul.f32 %v130, 0.6
        %v355 = vmul.f32 %v131, 0.6
        %v356 = vmul.f32 %v132, 0.6
        %v357 = vmul.f32 %v133, 0.6
        %v362 = vrot.slane %v354, 1
        %v363 = vrot.slane %v355, 1
        %v364 = vrot.slane %v356, 1
        %v365 = vrot.slane %v357, 1
        %v370 = vadd.f32 %v114, %v362
        %v371 = vadd.f32 %v115, %v363
        %v372 = vadd.f32 %v116, %v364
        %v373 = vadd.f32 %v117, %v365
        %v374 = vmul.f32 %v130, 0.06666667
        %v375 = vmul.f32 %v131, 0.06666667
        %v376 = vmul.f32 %v132, 0.06666667
        %v377 = vmul.f32 %v133, 0.06666667
        %v382 = vrot.slane %v374, 1
        %v383 = vrot.slane %v375, 1
        %v384 = vrot.slane %v376, 1
        %v385 = vrot.slane %v377, 1
        %v390 = vadd.f32 %v114, %v382
        %v391 = vadd.f32 %v115, %v383
        %v392 = vadd.f32 %v116, %v384
        %v393 = vadd.f32 %v117, %v385
        %v394 = vmul.f32 %v130, 0.53333336
        %v395 = vmul.f32 %v131, 0.53333336
        %v396 = vmul.f32 %v132, 0.53333336
        %v397 = vmul.f32 %v133, 0.53333336
        %v402 = vrot.slane %v394, 1
        %v403 = vrot.slane %v395, 1
        %v404 = vrot.slane %v396, 1
        %v405 = vrot.slane %v397, 1
        %v410 = vadd.f32 %v114, %v402
        %v411 = vadd.f32 %v115, %v403
        %v412 = vadd.f32 %v116, %v404
        %v413 = vadd.f32 %v117, %v405
        %v418 = vrot.slane %v150, 7
        %v419 = vrot.slane %v151, 7
        %v420 = vrot.slane %v152, 7
        %v421 = vrot.slane %v153, 7
        %v430 = vrot.slane %v170, 6
        %v431 = vrot.slane %v171, 6
        %v432 = vrot.slane %v172, 6
        %v433 = vrot.slane %v173, 6
        %v442 = vrot.slane %v190, 6
        %v443 = vrot.slane %v191, 6
        %v444 = vrot.slane %v192, 6
        %v445 = vrot.slane %v193, 6
        %v454 = vrot.slane %v210, 5
        %v455 = vrot.slane %v211, 5
        %v456 = vrot.slane %v212, 5
        %v457 = vrot.slane %v213, 5
        %v466 = vrot.slane %v230, 5
        %v467 = vrot.slane %v231, 5
        %v468 = vrot.slane %v232, 5
        %v469 = vrot.slane %v233, 5
        %v478 = vrot.slane %v250, 4
        %v479 = vrot.slane %v251, 4
        %v480 = vrot.slane %v252, 4
        %v481 = vrot.slane %v253, 4
        %v490 = vrot.slane %v270, 4
        %v491 = vrot.slane %v271, 4
        %v492 = vrot.slane %v272, 4
        %v493 = vrot.slane %v273, 4
        %v502 = vrot.slane %v290, 3
        %v503 = vrot.slane %v291, 3
        %v504 = vrot.slane %v292, 3
        %v505 = vrot.slane %v293, 3
        %v514 = vrot.slane %v310, 3
        %v515 = vrot.slane %v311, 3
        %v516 = vrot.slane %v312, 3
        %v517 = vrot.slane %v313, 3
        %v526 = vrot.slane %v330, 2
        %v527 = vrot.slane %v331, 2
        %v528 = vrot.slane %v332, 2
        %v529 = vrot.slane %v333, 2
        %v538 = vrot.slane %v350, 2
        %v539 = vrot.slane %v351, 2
        %v540 = vrot.slane %v352, 2
        %v541 = vrot.slane %v353, 2
        %v550 = vrot.slane %v370, 1
        %v551 = vrot.slane %v371, 1
        %v552 = vrot.slane %v372, 1
        %v553 = vrot.slane %v373, 1
        %v562 = vrot.slane %v390, 1
        %v563 = vrot.slane %v391, 1
        %v564 = vrot.slane %v392, 1
        %v565 = vrot.slane %v393, 1
        %vm570 = vcmask 1040384
        %v571 = vsel %vm570, %v114, %v418
        %v572 = vsel %vm570, %v115, %v419
        %v573 = vsel %vm570, %v116, %v420
        %v574 = vsel %vm570, %v117, %v421
        %vm575 = vcmask 1041408
        %v576 = vsel %vm575, %v571, %v430
        %v577 = vsel %vm575, %v572, %v431
        %v578 = vsel %vm575, %v573, %v432
        %v579 = vsel %vm575, %v574, %v433
        %vm580 = vcmask 1042432
        %v581 = vsel %vm580, %v576, %v442
        %v582 = vsel %vm580, %v577, %v443
        %v583 = vsel %vm580, %v578, %v444
        %v584 = vsel %vm580, %v579, %v445
        %vm585 = vcmask 1043456
        %v586 = vsel %vm585, %v581, %v454
        %v587 = vsel %vm585, %v582, %v455
        %v588 = vsel %vm585, %v583, %v456
        %v589 = vsel %vm585, %v584, %v457
        %vm590 = vcmask 1044480
        %v591 = vsel %vm590, %v586, %v466
        %v592 = vsel %vm590, %v587, %v467
        %v593 = vsel %vm590, %v588, %v468
        %v594 = vsel %vm590, %v589, %v469
        %vm595 = vcmask 1045504
        %v596 = vsel %vm595, %v591, %v478
        %v597 = vsel %vm595, %v592, %v479
        %v598 = vsel %vm595, %v593, %v480
        %v599 = vsel %vm595, %v594, %v481
        %vm600 = vcmask 1046528
        %v601 = vsel %vm600, %v596, %v490
        %v602 = vsel %vm600, %v597, %v491
        %v603 = vsel %vm600, %v598, %v492
        %v604 = vsel %vm600, %v599, %v493
        %v605 = vsel %vm570, %v502, %v514
        %v606 = vsel %vm570, %v503, %v515
        %v607 = vsel %vm570, %v504, %v516
        %v608 = vsel %vm570, %v505, %v517
        %v609 = vsel %vm575, %v605, %v526
        %v610 = vsel %vm575, %v606, %v527
        %v611 = vsel %vm575, %v607, %v528
        %v612 = vsel %vm575, %v608, %v529
        %v613 = vsel %vm580, %v609, %v538
        %v614 = vsel %vm580, %v610, %v539
        %v615 = vsel %vm580, %v611, %v540
        %v616 = vsel %vm580, %v612, %v541
        %v617 = vsel %vm585, %v613, %v550
        %v618 = vsel %vm585, %v614, %v551
        %v619 = vsel %vm585, %v615, %v552
        %v620 = vsel %vm585, %v616, %v553
        %v621 = vsel %vm590, %v617, %v562
        %v622 = vsel %vm590, %v618, %v563
        %v623 = vsel %vm590, %v619, %v564
        %v624 = vsel %vm590, %v620, %v565
        %v625 = vsel %vm595, %v621, %v410
        %v626 = vsel %vm595, %v622, %v411
        %v627 = vsel %vm595, %v623, %v412
        %v628 = vsel %vm595, %v624, %v413
        %v629 = vsel %vm600, %v625, %v114
        %v630 = vsel %vm600, %v626, %v115
        %v631 = vsel %vm600, %v627, %v116
        %v632 = vsel %vm600, %v628, %v117
        %633 = vst [vmem:[%s106] sm:$0xff] %v601
        %634 = vst [vmem:[%s106 + $0x8] sm:$0xff] %v602
        %635 = vst [vmem:[%s106 + $0x10] sm:$0xff] %v603
        %636 = vst [vmem:[%s106 + $0x18] sm:$0xff] %v604
        %637 = vst [vmem:[%s106 + $0x20] sm:$0xff] %v629
        %638 = vst [vmem:[%s106 + $0x28] sm:$0xff] %v630
        %639 = vst [vmem:[%s106 + $0x30] sm:$0xff] %v631
        %640 = vst [vmem:[%s106 + $0x38] sm:$0xff] %v632
        %s641 = sand.u32 %s46, 1
        %s642 = sand.u32 %s46, 1
        %s643 = smul.addr %s642, 64
        %s644 = scalar_lea.vmem [#allocation2], %s643
        // Predicated region
        $region25: #{decoder_block_forward.6} parent=23 // pred_check
          %p645 = pneg %p56
        $region26: #{decoder_block_forward.6} parent=23 // pred_check_branch
          %647 = sbr.rel (%p645) target = $region28
        $region27: #{decoder_block_forward.6} parent=23 // pred_region
          %s648 = smul.u32 4, %s12
          %s649 = smul.addr %s648, 8
          %s650 = scalar_lea.vmem %s1, %s649
          // Predicated region
          $region29: #{decoder_block_forward.6} parent=27 // pred_check
            _
          $region30: #{decoder_block_forward.6} parent=27 // pred_check_branch
            %652 = sbr.rel (0) target = $region32
          $region31: #{decoder_block_forward.6} parent=27 // pred_region
            // Predicated region
            $region33: #{decoder_block_forward.6} parent=31 // pred_check
              _
            $region34: #{decoder_block_forward.6} parent=31 // pred_check_branch
              %654 = sbr.rel (0) target = $region36
            $region35: #{decoder_block_forward.6} parent=31 // pred_region
              loop: start=0, step=1, limit=1
              $region37: #{decoder_block_forward.6} parent=35 // loop_pre_header
                _
              $region38: #{decoder_block_forward.6} parent=35 // loop_header
                %s656 = sphi 0, %s660
                %p657 = scmp.ge.s32.totalorder %s656, 1
                %s661 = sphi %s644, %s644
                %s662 = sphi %s650, %s650
              $region39: #{decoder_block_forward.6} parent=35 // loop_header_branch
                %659 = sbr.rel (%p657) target = $region43
              $region40: #{decoder_block_forward.6} parent=35 // loop_body
                %v663 = vld [vmem:[%s661] sm:$0xff]
                %664 = vst [vmem:[%s662] sm:$0xff] %v663
                %v665 = vld [vmem:[%s661 + $0x8] sm:$0xff]
                %666 = vst [vmem:[%s662 + $0x8] sm:$0xff] %v665
                %v667 = vld [vmem:[%s661 + $0x10] sm:$0xff]
                %668 = vst [vmem:[%s662 + $0x10] sm:$0xff] %v667
                %v669 = vld [vmem:[%s661 + $0x18] sm:$0xff]
                %670 = vst [vmem:[%s662 + $0x18] sm:$0xff] %v669
                %v671 = vld [vmem:[%s661 + $0x20] sm:$0xff]
                %672 = vst [vmem:[%s662 + $0x80] sm:$0xff] %v671
                %v673 = vld [vmem:[%s661 + $0x28] sm:$0xff]
                %674 = vst [vmem:[%s662 + $0x88] sm:$0xff] %v673
                %v675 = vld [vmem:[%s661 + $0x30] sm:$0xff]
                %676 = vst [vmem:[%s662 + $0x90] sm:$0xff] %v675
                %v677 = vld [vmem:[%s661 + $0x38] sm:$0xff]
                %678 = vst [vmem:[%s662 + $0x98] sm:$0xff] %v677
              $region41: #{decoder_block_forward.6} parent=35 // loop_footer
                %s660 = sadd.s32 1, %s656
              $region42: #{decoder_block_forward.6} parent=35 // loop_footer_branch
                %655 = sbr.rel target = $region38
              $region43: #{decoder_block_forward.6} parent=35 // loop_exit
                _
            $region36: #{decoder_block_forward.6} parent=31 // pred_fallthru
              _
            // Predicated region
            $region44: #{decoder_block_forward.6} parent=31 // pred_check
              _
            $region45: #{decoder_block_forward.6} parent=31 // pred_check_branch
              %680 = sbr.rel target = $region47
            $region46: #{decoder_block_forward.6} parent=31 // pred_region
              _
            $region47: #{decoder_block_forward.6} parent=31 // pred_fallthru
              _
          $region32: #{decoder_block_forward.6} parent=27 // pred_fallthru
            _
          %681 = vnop
        $region28: #{decoder_block_forward.6} parent=23 // pred_fallthru
          _
      $region24: #{decoder_block_forward.6} parent=5 // pred_fallthru
        _
      %p682 = scmp.le.s32.totalorder 2, %s7
      // Predicated region
      $region48: #{decoder_block_forward.6} parent=5 // pred_check
        %p683 = pneg %p682
      $region49: #{decoder_block_forward.6} parent=5 // pred_check_branch
        %685 = sbr.rel (%p683) target = $region51
      $region50: #{decoder_block_forward.6} parent=5 // pred_region
        %s686 = ssub.s32 %s7, 2
        // Predicated region
        $region52: #{decoder_block_forward.6} parent=50 // pred_check
          %p687 = pneg %p62
        $region53: #{decoder_block_forward.6} parent=50 // pred_check_branch
          %689 = sbr.rel (%p687) target = $region55
        $region54: #{decoder_block_forward.6} parent=50 // pred_region
          %s690 = sand.u32 %s47, 1
          %s691 = sand.u32 %s47, 1
          %s692 = smul.addr %s691, 64
          %s693 = scalar_lea.vmem [#allocation2], %s692
        $region55: #{decoder_block_forward.6} parent=50 // pred_fallthru
          _
      $region51: #{decoder_block_forward.6} parent=5 // pred_fallthru
        _
    $region6: #{decoder_block_forward.6} parent=1 // loop_footer
      %s11 = sadd.s32 1, %s7
    $region7: #{decoder_block_forward.6} parent=1 // loop_footer_branch
      %6 = sbr.rel target = $region3
    $region8: #{decoder_block_forward.6} parent=1 // loop_exit
      _

// kernel: decoder_block_forward.7
$region0: #{decoder_block_forward.7}
  #allocation0 [shape = 'u32[]', space=smem, size = 0x4, offset = 0x4, fixed_abs, tag = 'smem constant byte address 0x4 - core index']
  #allocation1 [shape = 'u32[144,128]{1,0:T(1,128)}', space=vmem, size = 0x12000, scoped, tag = 'internal scratch']
  %s0 = inlined_call_operand.vmem [shape: f32[8,4096], index: 0, kind: input, shape index: {}]
  %s1 = inlined_call_operand.vmem [shape: f32[16,4096], index: 1, kind: output, shape index: {}]
  %s2 = sld [smem:[#allocation0]]
  $region56: #{decoder_block_forward.7} parent=0
    _
  %s4 = ssub.s32 1, %s2
  %s5 = scalar_select 0, %s4, %s2
  $region1: #{decoder_block_forward.7} parent=0
    #allocation2 [shape = 'u8[65536]{0}', space=vmem, size = 0x10000, scoped, tag = 'output window, operand 0']
    loop: start=0, step=1, limit=10
    $region2: #{decoder_block_forward.7} parent=1 // loop_pre_header
      _
    $region3: #{decoder_block_forward.7} parent=1 // loop_header
      %s7 = sphi 0, %s11
      %p8 = scmp.ge.s32.totalorder %s7, 10
      %s17 = sphi 0, %s19
      %s20 = sphi 0, %s17
      %s21 = sphi 0, %s20
      %s37 = sphi 0, %s21
      %s43 = sphi 0, %s45
      %s46 = sphi 0, %s43
      %s47 = sphi 0, %s46
      %s63 = sphi 0, %s47
    $region4: #{decoder_block_forward.7} parent=1 // loop_header_branch
      %10 = sbr.rel (%p8) target = $region8
    $region5: #{decoder_block_forward.7} parent=1 // loop_body
      %s12 = ssub.s32 %s7, 1
      %s13 = ssub.s32 %s7, 2
      %s14 = sadd.s32 %s7, 1
      %s15 = ssub.s32 %s7, %s14
      %p16 = scmp.eq.s32.totalorder %s15, 0
      %s18 = sadd.s32 %s17, 1
      %s19 = scalar_select %p16, %s17, %s18
      %p22 = pneg %p16
      %p23 = scmp.eq.s32.totalorder %s7, 7
      %p24 = por %p22, %p23
      %p25 = scmp.ne.s32.totalorder %s17, %s20
      %p26 = scmp.eq.s32.totalorder %s7, 0
      %p27 = por %p25, %p26
      %p28 = scmp.ne.s32.totalorder %s17, %s20
      %p29 = scmp.eq.s32.totalorder %s12, 7
      %p30 = por %p28, %p29
      %p31 = scmp.ne.s32.totalorder %s20, %s21
      %p32 = scmp.eq.s32.totalorder %s12, 0
      %p33 = por %p31, %p32
      %p34 = scmp.ne.s32.totalorder %s20, %s21
      %p35 = scmp.eq.s32.totalorder %s13, 7
      %p36 = por %p34, %p35
      %p38 = scmp.ne.s32.totalorder %s21, %s37
      %p39 = scmp.eq.s32.totalorder %s13, 0
      %p40 = por %p38, %p39
      %s41 = ssub.s32 %s7, %s14
      %p42 = scmp.eq.s32.totalorder %s41, 0
      %s44 = sadd.s32 %s43, 1
      %s45 = scalar_select %p42, %s43, %s44
      %p48 = pneg %p42
      %p49 = scmp.eq.s32.totalorder %s7, 7
      %p50 = por %p48, %p49
      %p51 = scmp.ne.s32.totalorder %s43, %s46
      %p52 = scmp.eq.s32.totalorder %s7, 0
      %p53 = por %p51, %p52
      %p54 = scmp.ne.s32.totalorder %s43, %s46
      %p55 = scmp.eq.s32.totalorder %s12, 7
      %p56 = por %p54, %p55
      %p57 = scmp.ne.s32.totalorder %s46, %s47
      %p58 = scmp.eq.s32.totalorder %s12, 0
      %p59 = por %p57, %p58
      %p60 = scmp.ne.s32.totalorder %s46, %s47
      %p61 = scmp.eq.s32.totalorder %s13, 7
      %p62 = por %p60, %p61
      %p64 = scmp.ne.s32.totalorder %s47, %s63
      %p65 = scmp.eq.s32.totalorder %s13, 0
      %p66 = por %p64, %p65
      %p67 = scmp.le.s32.totalorder 1, %s7
      %p68 = scmp.lt.s32.totalorder %s7, 9
      %p69 = pnand %p67, %p68
      %p70 = pneg %p69
      // Predicated region
      $region9: #{decoder_block_forward.7} parent=5 // pred_check
        _
      $region10: #{decoder_block_forward.7} parent=5 // pred_check_branch
        %72 = sbr.rel (%p69) target = $region12
      $region11: #{decoder_block_forward.7} parent=5 // pred_region
        %s73 = ssub.s32 %s7, 1
      $region12: #{decoder_block_forward.7} parent=5 // pred_fallthru
        _
      %p74 = scmp.lt.s32.totalorder %s7, 8
      // Predicated region
      $region13: #{decoder_block_forward.7} parent=5 // pred_check
        %p75 = pneg %p74
      $region14: #{decoder_block_forward.7} parent=5 // pred_check_branch
        %77 = sbr.rel (%p75) target = $region16
      $region15: #{decoder_block_forward.7} parent=5 // pred_region
        // Predicated region
        $region17: #{decoder_block_forward.7} parent=15 // pred_check
          %p78 = pneg %p27
        $region18: #{decoder_block_forward.7} parent=15 // pred_check_branch
          %80 = sbr.rel (%p78) target = $region20
        $region19: #{decoder_block_forward.7} parent=15 // pred_region
          %s81 = smul.u32 4, %s7
          %p82 = scmp.lt.s32.totalorder %s81, 31
          %s83 = scalar_select %p82, %s81, 31
          %s84 = smul.addr %s83, 8
          %s85 = scalar_lea.vmem %s0, %s84
          %s86 = smul.u32 4, %s7
        $region20: #{decoder_block_forward.7} parent=15 // pred_fallthru
          _
      $region16: #{decoder_block_forward.7} parent=5 // pred_fallthru
        _
      %p87 = scmp.le.s32.totalorder 1, %s7
      %p88 = scmp.lt.s32.totalorder %s7, 9
      %p89 = pnand %p87, %p88
      %p90 = pneg %p89
      // Predicated region
      $region21: #{decoder_block_forward.7} parent=5 // pred_check
        _
      $region22: #{decoder_block_forward.7} parent=5 // pred_check_branch
        %92 = sbr.rel (%p89) target = $region24
      $region23: #{decoder_block_forward.7} parent=5 // pred_region
        %s93 = ssub.s32 %s7, 1
        %s94 = smul.u32 4, %s12
        %p95 = scmp.lt.s32.totalorder %s94, 31
        %s96 = scalar_select %p95, %s94, 31
        %s97 = smul.addr %s96, 8
        %s98 = scalar_lea.vmem %s0, %s97
        %p99 = pneg %p33
        %p100 = pneg %p30
        %p101 = pneg %p59
        %p102 = pneg %p56
        %s103 = sand.u32 %s46, 1
        %s104 = sand.u32 %s46, 1
        %s105 = smul.addr %s104, 64
        %s106 = scalar_lea.vmem [#allocation2], %s105
        %s107 = smul.u32 4, %s12
        %p108 = scmp.lt.s32.totalorder %s107, 31
        %s109 = scalar_select %p108, %s107, 31
        %s110 = smul.addr %s109, 8
        %s111 = scalar_lea.vmem %s0, %s110
        %s112 = smul.u32 4, %s12
        %s113 = smul.u32 4, %s12
        %v114 = vld [vmem:[%s111] sm:$0xff]
        %v115 = vld [vmem:[%s111 + $0x8] sm:$0xff]
        %v116 = vld [vmem:[%s111 + $0x10] sm:$0xff]
        %v117 = vld [vmem:[%s111 + $0x18] sm:$0xff]
        %v122 = vrot.slane %v114, 7
        %v123 = vrot.slane %v115, 7
        %v124 = vrot.slane %v116, 7
        %v125 = vrot.slane %v117, 7
        %v130 = vsub.f32 %v114, %v122
        %v131 = vsub.f32 %v115, %v123
        %v132 = vsub.f32 %v116, %v124
        %v133 = vsub.f32 %v117, %v125
        %v134 = vmul.f32 %v130, 0.46666667
        %v135 = vmul.f32 %v131, 0.46666667
        %v136 = vmul.f32 %v132, 0.46666667
        %v137 = vmul.f32 %v133, 0.46666667
        %v142 = vrot.slane %v134, 1
        %v143 = vrot.slane %v135, 1
        %v144 = vrot.slane %v136, 1
        %v145 = vrot.slane %v137, 1
        %v150 = vadd.f32 %v114, %v142
        %v151 = vadd.f32 %v115, %v143
        %v152 = vadd.f32 %v116, %v144
        %v153 = vadd.f32 %v117, %v145
        %v154 = vmul.f32 %v130, 0.93333334
        %v155 = vmul.f32 %v131, 0.93333334
        %v156 = vmul.f32 %v132, 0.93333334
        %v157 = vmul.f32 %v133, 0.93333334
        %v162 = vrot.slane %v154, 1
        %v163 = vrot.slane %v155, 1
        %v164 = vrot.slane %v156, 1
        %v165 = vrot.slane %v157, 1
        %v170 = vadd.f32 %v114, %v162
        %v171 = vadd.f32 %v115, %v163
        %v172 = vadd.f32 %v116, %v164
        %v173 = vadd.f32 %v117, %v165
        %v174 = vmul.f32 %v130, 0.4
        %v175 = vmul.f32 %v131, 0.4
        %v176 = vmul.f32 %v132, 0.4
        %v177 = vmul.f32 %v133, 0.4
        %v182 = vrot.slane %v174, 1
        %v183 = vrot.slane %v175, 1
        %v184 = vrot.slane %v176, 1
        %v185 = vrot.slane %v177, 1
        %v190 = vadd.f32 %v114, %v182
        %v191 = vadd.f32 %v115, %v183
        %v192 = vadd.f32 %v116, %v184
        %v193 = vadd.f32 %v117, %v185
        %v194 = vmul.f32 %v130, 0.8666667
        %v195 = vmul.f32 %v131, 0.8666667
        %v196 = vmul.f32 %v132, 0.8666667
        %v197 = vmul.f32 %v133, 0.8666667
        %v202 = vrot.slane %v194, 1
        %v203 = vrot.slane %v195, 1
        %v204 = vrot.slane %v196, 1
        %v205 = vrot.slane %v197, 1
        %v210 = vadd.f32 %v114, %v202
        %v211 = vadd.f32 %v115, %v203
        %v212 = vadd.f32 %v116, %v204
        %v213 = vadd.f32 %v117, %v205
        %v214 = vmul.f32 %v130, 0.33333334
        %v215 = vmul.f32 %v131, 0.33333334
        %v216 = vmul.f32 %v132, 0.33333334
        %v217 = vmul.f32 %v133, 0.33333334
        %v222 = vrot.slane %v214, 1
        %v223 = vrot.slane %v215, 1
        %v224 = vrot.slane %v216, 1
        %v225 = vrot.slane %v217, 1
        %v230 = vadd.f32 %v114, %v222
        %v231 = vadd.f32 %v115, %v223
        %v232 = vadd.f32 %v116, %v224
        %v233 = vadd.f32 %v117, %v225
        %v234 = vmul.f32 %v130, 0.8
        %v235 = vmul.f32 %v131, 0.8
        %v236 = vmul.f32 %v132, 0.8
        %v237 = vmul.f32 %v133, 0.8
        %v242 = vrot.slane %v234, 1
        %v243 = vrot.slane %v235, 1
        %v244 = vrot.slane %v236, 1
        %v245 = vrot.slane %v237, 1
        %v250 = vadd.f32 %v114, %v242
        %v251 = vadd.f32 %v115, %v243
        %v252 = vadd.f32 %v116, %v244
        %v253 = vadd.f32 %v117, %v245
        %v254 = vmul.f32 %v130, 0.26666668
        %v255 = vmul.f32 %v131, 0.26666668
        %v256 = vmul.f32 %v132, 0.26666668
        %v257 = vmul.f32 %v133, 0.26666668
        %v262 = vrot.slane %v254, 1
        %v263 = vrot.slane %v255, 1
        %v264 = vrot.slane %v256, 1
        %v265 = vrot.slane %v257, 1
        %v270 = vadd.f32 %v114, %v262
        %v271 = vadd.f32 %v115, %v263
        %v272 = vadd.f32 %v116, %v264
        %v273 = vadd.f32 %v117, %v265
        %v274 = vmul.f32 %v130, 0.73333335
        %v275 = vmul.f32 %v131, 0.73333335
        %v276 = vmul.f32 %v132, 0.73333335
        %v277 = vmul.f32 %v133, 0.73333335
        %v282 = vrot.slane %v274, 1
        %v283 = vrot.slane %v275, 1
        %v284 = vrot.slane %v276, 1
        %v285 = vrot.slane %v277, 1
        %v290 = vadd.f32 %v114, %v282
        %v291 = vadd.f32 %v115, %v283
        %v292 = vadd.f32 %v116, %v284
        %v293 = vadd.f32 %v117, %v285
        %v294 = vmul.f32 %v130, 0.2
        %v295 = vmul.f32 %v131, 0.2
        %v296 = vmul.f32 %v132, 0.2
        %v297 = vmul.f32 %v133, 0.2
        %v302 = vrot.slane %v294, 1
        %v303 = vrot.slane %v295, 1
        %v304 = vrot.slane %v296, 1
        %v305 = vrot.slane %v297, 1
        %v310 = vadd.f32 %v114, %v302
        %v311 = vadd.f32 %v115, %v303
        %v312 = vadd.f32 %v116, %v304
        %v313 = vadd.f32 %v117, %v305
        %v314 = vmul.f32 %v130, 0.6666667
        %v315 = vmul.f32 %v131, 0.6666667
        %v316 = vmul.f32 %v132, 0.6666667
        %v317 = vmul.f32 %v133, 0.6666667
        %v322 = vrot.slane %v314, 1
        %v323 = vrot.slane %v315, 1
        %v324 = vrot.slane %v316, 1
        %v325 = vrot.slane %v317, 1
        %v330 = vadd.f32 %v114, %v322
        %v331 = vadd.f32 %v115, %v323
        %v332 = vadd.f32 %v116, %v324
        %v333 = vadd.f32 %v117, %v325
        %v334 = vmul.f32 %v130, 0.13333334
        %v335 = vmul.f32 %v131, 0.13333334
        %v336 = vmul.f32 %v132, 0.13333334
        %v337 = vmul.f32 %v133, 0.13333334
        %v342 = vrot.slane %v334, 1
        %v343 = vrot.slane %v335, 1
        %v344 = vrot.slane %v336, 1
        %v345 = vrot.slane %v337, 1
        %v350 = vadd.f32 %v114, %v342
        %v351 = vadd.f32 %v115, %v343
        %v352 = vadd.f32 %v116, %v344
        %v353 = vadd.f32 %v117, %v345
        %v354 = vmul.f32 %v130, 0.6
        %v355 = vmul.f32 %v131, 0.6
        %v356 = vmul.f32 %v132, 0.6
        %v357 = vmul.f32 %v133, 0.6
        %v362 = vrot.slane %v354, 1
        %v363 = vrot.slane %v355, 1
        %v364 = vrot.slane %v356, 1
        %v365 = vrot.slane %v357, 1
        %v370 = vadd.f32 %v114, %v362
        %v371 = vadd.f32 %v115, %v363
        %v372 = vadd.f32 %v116, %v364
        %v373 = vadd.f32 %v117, %v365
        %v374 = vmul.f32 %v130, 0.06666667
        %v375 = vmul.f32 %v131, 0.06666667
        %v376 = vmul.f32 %v132, 0.06666667
        %v377 = vmul.f32 %v133, 0.06666667
        %v382 = vrot.slane %v374, 1
        %v383 = vrot.slane %v375, 1
        %v384 = vrot.slane %v376, 1
        %v385 = vrot.slane %v377, 1
        %v390 = vadd.f32 %v114, %v382
        %v391 = vadd.f32 %v115, %v383
        %v392 = vadd.f32 %v116, %v384
        %v393 = vadd.f32 %v117, %v385
        %v394 = vmul.f32 %v130, 0.53333336
        %v395 = vmul.f32 %v131, 0.53333336
        %v396 = vmul.f32 %v132, 0.53333336
        %v397 = vmul.f32 %v133, 0.53333336
        %v402 = vrot.slane %v394, 1
        %v403 = vrot.slane %v395, 1
        %v404 = vrot.slane %v396, 1
        %v405 = vrot.slane %v397, 1
        %v410 = vadd.f32 %v114, %v402
        %v411 = vadd.f32 %v115, %v403
        %v412 = vadd.f32 %v116, %v404
        %v413 = vadd.f32 %v117, %v405
        %v418 = vrot.slane %v150, 7
        %v419 = vrot.slane %v151, 7
        %v420 = vrot.slane %v152, 7
        %v421 = vrot.slane %v153, 7
        %v430 = vrot.slane %v170, 6
        %v431 = vrot.slane %v171, 6
        %v432 = vrot.slane %v172, 6
        %v433 = vrot.slane %v173, 6
        %v442 = vrot.slane %v190, 6
        %v443 = vrot.slane %v191, 6
        %v444 = vrot.slane %v192, 6
        %v445 = vrot.slane %v193, 6
        %v454 = vrot.slane %v210, 5
        %v455 = vrot.slane %v211, 5
        %v456 = vrot.slane %v212, 5
        %v457 = vrot.slane %v213, 5
        %v466 = vrot.slane %v230, 5
        %v467 = vrot.slane %v231, 5
        %v468 = vrot.slane %v232, 5
        %v469 = vrot.slane %v233, 5
        %v478 = vrot.slane %v250, 4
        %v479 = vrot.slane %v251, 4
        %v480 = vrot.slane %v252, 4
        %v481 = vrot.slane %v253, 4
        %v490 = vrot.slane %v270, 4
        %v491 = vrot.slane %v271, 4
        %v492 = vrot.slane %v272, 4
        %v493 = vrot.slane %v273, 4
        %v502 = vrot.slane %v290, 3
        %v503 = vrot.slane %v291, 3
        %v504 = vrot.slane %v292, 3
        %v505 = vrot.slane %v293, 3
        %v514 = vrot.slane %v310, 3
        %v515 = vrot.slane %v311, 3
        %v516 = vrot.slane %v312, 3
        %v517 = vrot.slane %v313, 3
        %v526 = vrot.slane %v330, 2
        %v527 = vrot.slane %v331, 2
        %v528 = vrot.slane %v332, 2
        %v529 = vrot.slane %v333, 2
        %v538 = vrot.slane %v350, 2
        %v539 = vrot.slane %v351, 2
        %v540 = vrot.slane %v352, 2
        %v541 = vrot.slane %v353, 2
        %v550 = vrot.slane %v370, 1
        %v551 = vrot.slane %v371, 1
        %v552 = vrot.slane %v372, 1
        %v553 = vrot.slane %v373, 1
        %v562 = vrot.slane %v390, 1
        %v563 = vrot.slane %v391, 1
        %v564 = vrot.slane %v392, 1
        %v565 = vrot.slane %v393, 1
        %vm570 = vcmask 1040384
        %v571 = vsel %vm570, %v114, %v418
        %v572 = vsel %vm570, %v115, %v419
        %v573 = vsel %vm570, %v116, %v420
        %v574 = vsel %vm570, %v117, %v421
        %vm575 = vcmask 1041408
        %v576 = vsel %vm575, %v571, %v430
        %v577 = vsel %vm575, %v572, %v431
        %v578 = vsel %vm575, %v573, %v432
        %v579 = vsel %vm575, %v574, %v433
        %vm580 = vcmask 1042432
        %v581 = vsel %vm580, %v576, %v442
        %v582 = vsel %vm580, %v577, %v443
        %v583 = vsel %vm580, %v578, %v444
        %v584 = vsel %vm580, %v579, %v445
        %vm585 = vcmask 1043456
        %v586 = vsel %vm585, %v581, %v454
        %v587 = vsel %vm585, %v582, %v455
        %v588 = vsel %vm585, %v583, %v456
        %v589 = vsel %vm585, %v584, %v457
        %vm590 = vcmask 1044480
        %v591 = vsel %vm590, %v586, %v466
        %v592 = vsel %vm590, %v587, %v467
        %v593 = vsel %vm590, %v588, %v468
        %v594 = vsel %vm590, %v589, %v469
        %vm595 = vcmask 1045504
        %v596 = vsel %vm595, %v591, %v478
        %v597 = vsel %vm595, %v592, %v479
        %v598 = vsel %vm595, %v593, %v480
        %v599 = vsel %vm595, %v594, %v481
        %vm600 = vcmask 1046528
        %v601 = vsel %vm600, %v596, %v490
        %v602 = vsel %vm600, %v597, %v491
        %v603 = vsel %vm600, %v598, %v492
        %v604 = vsel %vm600, %v599, %v493
        %v605 = vsel %vm570, %v502, %v514
        %v606 = vsel %vm570, %v503, %v515
        %v607 = vsel %vm570, %v504, %v516
        %v608 = vsel %vm570, %v505, %v517
        %v609 = vsel %vm575, %v605, %v526
        %v610 = vsel %vm575, %v606, %v527
        %v611 = vsel %vm575, %v607, %v528
        %v612 = vsel %vm575, %v608, %v529
        %v613 = vsel %vm580, %v609, %v538
        %v614 = vsel %vm580, %v610, %v539
        %v615 = vsel %vm580, %v611, %v540
        %v616 = vsel %vm580, %v612, %v541
        %v617 = vsel %vm585, %v613, %v550
        %v618 = vsel %vm585, %v614, %v551
        %v619 = vsel %vm585, %v615, %v552
        %v620 = vsel %vm585, %v616, %v553
        %v621 = vsel %vm590, %v617, %v562
        %v622 = vsel %vm590, %v618, %v563
        %v623 = vsel %vm590, %v619, %v564
        %v624 = vsel %vm590, %v620, %v565
        %v625 = vsel %vm595, %v621, %v410
        %v626 = vsel %vm595, %v622, %v411
        %v627 = vsel %vm595, %v623, %v412
        %v628 = vsel %vm595, %v624, %v413
        %v629 = vsel %vm600, %v625, %v114
        %v630 = vsel %vm600, %v626, %v115
        %v631 = vsel %vm600, %v627, %v116
        %v632 = vsel %vm600, %v628, %v117
        %vm633 = vcmp.ge.f32.partialorder %v601, 0.0
        %vm634 = vcmp.ge.f32.partialorder %v602, 0.0
        %vm635 = vcmp.ge.f32.partialorder %v603, 0.0
        %vm636 = vcmp.ge.f32.partialorder %v604, 0.0
        %vm637 = vcmp.ge.f32.partialorder %v629, 0.0
        %vm638 = vcmp.ge.f32.partialorder %v630, 0.0
        %vm639 = vcmp.ge.f32.partialorder %v631, 0.0
        %vm640 = vcmp.ge.f32.partialorder %v632, 0.0
        %v641 = vmul.f32 %v601, 0.01
        %v642 = vmul.f32 %v602, 0.01
        %v643 = vmul.f32 %v603, 0.01
        %v644 = vmul.f32 %v604, 0.01
        %v645 = vmul.f32 %v629, 0.01
        %v646 = vmul.f32 %v630, 0.01
        %v647 = vmul.f32 %v631, 0.01
        %v648 = vmul.f32 %v632, 0.01
        %v649 = vsel %vm633, %v601, %v641
        %v650 = vsel %vm634, %v602, %v642
        %v651 = vsel %vm635, %v603, %v643
        %v652 = vsel %vm636, %v604, %v644
        %v653 = vsel %vm637, %v629, %v645
        %v654 = vsel %vm638, %v630, %v646
        %v655 = vsel %vm639, %v631, %v647
        %v656 = vsel %vm640, %v632, %v648
        %657 = vst [vmem:[%s106] sm:$0xff] %v649
        %658 = vst [vmem:[%s106 + $0x8] sm:$0xff] %v650
        %659 = vst [vmem:[%s106 + $0x10] sm:$0xff] %v651
        %660 = vst [vmem:[%s106 + $0x18] sm:$0xff] %v652
        %661 = vst [vmem:[%s106 + $0x20] sm:$0xff] %v653
        %662 = vst [vmem:[%s106 + $0x28] sm:$0xff] %v654
        %663 = vst [vmem:[%s106 + $0x30] sm:$0xff] %v655
        %664 = vst [vmem:[%s106 + $0x38] sm:$0xff] %v656
        %s665 = sand.u32 %s46, 1
        %s666 = sand.u32 %s46, 1
        %s667 = smul.addr %s666, 64
        %s668 = scalar_lea.vmem [#allocation2], %s667
        // Predicated region
        $region25: #{decoder_block_forward.7} parent=23 // pred_check
          %p669 = pneg %p56
        $region26: #{decoder_block_forward.7} parent=23 // pred_check_branch
          %671 = sbr.rel (%p669) target = $region28
        $region27: #{decoder_block_forward.7} parent=23 // pred_region
          %s672 = smul.u32 4, %s12
          %s673 = smul.addr %s672, 8
          %s674 = scalar_lea.vmem %s1, %s673
          // Predicated region
          $region29: #{decoder_block_forward.7} parent=27 // pred_check
            _
          $region30: #{decoder_block_forward.7} parent=27 // pred_check_branch
            %676 = sbr.rel (0) target = $region32
          $region31: #{decoder_block_forward.7} parent=27 // pred_region
            // Predicated region
            $region33: #{decoder_block_forward.7} parent=31 // pred_check
              _
            $region34: #{decoder_block_forward.7} parent=31 // pred_check_branch
              %678 = sbr.rel (0) target = $region36
            $region35: #{decoder_block_forward.7} parent=31 // pred_region
              loop: start=0, step=1, limit=1
              $region37: #{decoder_block_forward.7} parent=35 // loop_pre_header
                _
              $region38: #{decoder_block_forward.7} parent=35 // loop_header
                %s680 = sphi 0, %s684
                %p681 = scmp.ge.s32.totalorder %s680, 1
                %s685 = sphi %s668, %s668
                %s686 = sphi %s674, %s674
              $region39: #{decoder_block_forward.7} parent=35 // loop_header_branch
                %683 = sbr.rel (%p681) target = $region43
              $region40: #{decoder_block_forward.7} parent=35 // loop_body
                %v687 = vld [vmem:[%s685] sm:$0xff]
                %688 = vst [vmem:[%s686] sm:$0xff] %v687
                %v689 = vld [vmem:[%s685 + $0x8] sm:$0xff]
                %690 = vst [vmem:[%s686 + $0x8] sm:$0xff] %v689
                %v691 = vld [vmem:[%s685 + $0x10] sm:$0xff]
                %692 = vst [vmem:[%s686 + $0x10] sm:$0xff] %v691
                %v693 = vld [vmem:[%s685 + $0x18] sm:$0xff]
                %694 = vst [vmem:[%s686 + $0x18] sm:$0xff] %v693
                %v695 = vld [vmem:[%s685 + $0x20] sm:$0xff]
                %696 = vst [vmem:[%s686 + $0x100] sm:$0xff] %v695
                %v697 = vld [vmem:[%s685 + $0x28] sm:$0xff]
                %698 = vst [vmem:[%s686 + $0x108] sm:$0xff] %v697
                %v699 = vld [vmem:[%s685 + $0x30] sm:$0xff]
                %700 = vst [vmem:[%s686 + $0x110] sm:$0xff] %v699
                %v701 = vld [vmem:[%s685 + $0x38] sm:$0xff]
                %702 = vst [vmem:[%s686 + $0x118] sm:$0xff] %v701
              $region41: #{decoder_block_forward.7} parent=35 // loop_footer
                %s684 = sadd.s32 1, %s680
              $region42: #{decoder_block_forward.7} parent=35 // loop_footer_branch
                %679 = sbr.rel target = $region38
              $region43: #{decoder_block_forward.7} parent=35 // loop_exit
                _
            $region36: #{decoder_block_forward.7} parent=31 // pred_fallthru
              _
            // Predicated region
            $region44: #{decoder_block_forward.7} parent=31 // pred_check
              _
            $region45: #{decoder_block_forward.7} parent=31 // pred_check_branch
              %704 = sbr.rel target = $region47
            $region46: #{decoder_block_forward.7} parent=31 // pred_region
              _
            $region47: #{decoder_block_forward.7} parent=31 // pred_fallthru
              _
          $region32: #{decoder_block_forward.7} parent=27 // pred_fallthru
            _
          %705 = vnop
        $region28: #{decoder_block_forward.7} parent=23 // pred_fallthru
          _
      $region24: #{decoder_block_forward.7} parent=5 // pred_fallthru
        _
      %p706 = scmp.le.s32.totalorder 2, %s7
      // Predicated region
      $region48: #{decoder_block_forward.7} parent=5 // pred_check
        %p707 = pneg %p706
      $region49: #{decoder_block_forward.7} parent=5 // pred_check_branch
        %709 = sbr.rel (%p707) target = $region51
      $region50: #{decoder_block_forward.7} parent=5 // pred_region
        %s710 = ssub.s32 %s7, 2
        // Predicated region
        $region52: #{decoder_block_forward.7} parent=50 // pred_check
          %p711 = pneg %p62
        $region53: #{decoder_block_forward.7} parent=50 // pred_check_branch
          %713 = sbr.rel (%p711) target = $region55
        $region54: #{decoder_block_forward.7} parent=50 // pred_region
          %s714 = sand.u32 %s47, 1
          %s715 = sand.u32 %s47, 1
          %s716 = smul.addr %s715, 64
          %s717 = scalar_lea.vmem [#allocation2], %s716
        $region55: #{decoder_block_forward.7} parent=50 // pred_fallthru
          _
      $region51: #{decoder_block_forward.7} parent=5 // pred_fallthru
        _
    $region6: #{decoder_block_forward.7} parent=1 // loop_footer
      %s11 = sadd.s32 1, %s7
    $region7: #{decoder_block_forward.7} parent=1 // loop_footer_branch
      %6 = sbr.rel target = $region3
    $region8: #{decoder_block_forward.7} parent=1 // loop_exit
      _

</llo_original>
